<compile_context>
chip_gen: v7x
topology: tpu7x:2x2x1
jax: 0.10.0
libtpu: 0.0.40
codegen_flags: <defaults>
</compile_context>

<pallas_src>
import jax
import jax.numpy as jnp
from jax.experimental import pallas as pl
from jax.experimental.pallas import tpu as pltpu

LANE = 128  # node-row and edge axes padded to multiples of this


def _round_up(v, m):
    return (v + m - 1) // m * m


def _pad2d(x, rows, cols):
    return jnp.pad(x, ((0, rows - x.shape[0]), (0, cols - x.shape[1])))


# ---------------------------------------------------------------------------
# Fused Pallas kernel: both GCN layers + link decoder, fully VMEM-resident.
# ---------------------------------------------------------------------------
def gcn_fused_kernel(a_ref, x_ref, w1_ref, b1_ref, w2_ref, b2_ref,
                     ssrc_ref, sdst_ref, out_ref):
    # a_ref    : (Np, Np)  bf16  normalized adjacency A_hat (zero-padded)
    # x_ref    : (Np, Fi)  bf16  node features (Fi left unpadded)
    # w1_ref   : (Fi, H)   bf16
    # b1_ref   : (1, H)    f32
    # w2_ref   : (H, O)    bf16
    # b2_ref   : (1, O)    f32
    # ssrc_ref : (Ep, Np)  bf16  one-hot gather matrix for edge sources
    # sdst_ref : (Ep, Np)  bf16  one-hot gather matrix for edge destinations
    # out_ref  : (1, Ep)   f32   lane-dense logits
    a = a_ref[...]

    # conv1: relu(A_hat @ (X @ W1) + b1)
    xw1 = jnp.dot(x_ref[...], w1_ref[...], preferred_element_type=jnp.float32)
    h = jnp.dot(a, xw1.astype(jnp.bfloat16), preferred_element_type=jnp.float32)
    h = jnp.maximum(h + b1_ref[...], 0.0)

    # conv2: A_hat @ (H @ W2) + b2
    hw2 = jnp.dot(h.astype(jnp.bfloat16), w2_ref[...],
                  preferred_element_type=jnp.float32)
    z = jnp.dot(a, hw2.astype(jnp.bfloat16), preferred_element_type=jnp.float32)
    z = (z + b2_ref[...]).astype(jnp.bfloat16)

    # decode: (z[src] * z[dst]).sum(-1).  One-hot bf16 matmuls gather the rows
    # exactly (single nonzero per row, f32 accumulation); sum over O is a lane
    # reduce (XLU); final store is lane-dense (1, Ep).
    zs = jnp.dot(ssrc_ref[...], z, preferred_element_type=jnp.float32)
    zd = jnp.dot(sdst_ref[...], z, preferred_element_type=jnp.float32)
    out_ref[...] = jnp.sum(zs * zd, axis=-1)[None, :]


def gcn_forward_fused(a_p, x_p, w1_p, b1_p, w2_p, b2_p, s_src, s_dst):
    Ep = s_src.shape[0]
    vmem = lambda: pl.BlockSpec(memory_space=pltpu.MemorySpace.VMEM)
    return pl.pallas_call(
        gcn_fused_kernel,
        out_shape=jax.ShapeDtypeStruct((1, Ep), jnp.float32),
        in_specs=[vmem() for _ in range(8)],
        out_specs=vmem(),
    )(a_p, x_p, w1_p, b1_p, w2_p, b2_p, s_src, s_dst)


# ---------------------------------------------------------------------------
# Graph preprocessing (hoisted out of the jitted forward; graph is static).
# ---------------------------------------------------------------------------
def build_norm_adj(edge_index, num_nodes):
    # GCNConv semantics: A_hat = D^{-1/2} (A + I) D^{-1/2}
    src, dst = edge_index[0], edge_index[1]
    loop = jnp.arange(num_nodes, dtype=src.dtype)
    src = jnp.concatenate([src, loop])
    dst = jnp.concatenate([dst, loop])
    a = jnp.zeros((num_nodes, num_nodes), jnp.float32).at[dst, src].add(1.0)
    deg = a.sum(axis=1)
    dinv = jnp.where(deg > 0, 1.0 / jnp.sqrt(deg), 0.0)
    return dinv[:, None] * a * dinv[None, :]


def preprocess(x, edge_index, edge_label_index, params):
    N, F_in = x.shape
    Np = _round_up(N, LANE)                       # 300 -> 384 (not 512)
    E = edge_label_index.shape[1]
    Ep = _round_up(E, LANE)

    a_p = _pad2d(build_norm_adj(edge_index, N), Np, Np).astype(jnp.bfloat16)
    x_p = _pad2d(x, Np, F_in).astype(jnp.bfloat16)   # F_in stays unpadded
    w1_p = params["w1"].astype(jnp.bfloat16)
    b1_p = params["b1"].astype(jnp.float32)
    w2_p = params["w2"].astype(jnp.bfloat16)
    b2_p = params["b2"].astype(jnp.float32)

    # Padded edge slots index Np (out of range) -> all-zero one-hot rows.
    src = jnp.pad(edge_label_index[0], (0, Ep - E), constant_values=Np)
    dst = jnp.pad(edge_label_index[1], (0, Ep - E), constant_values=Np)
    s_src = jax.nn.one_hot(src, Np, dtype=jnp.bfloat16)
    s_dst = jax.nn.one_hot(dst, Np, dtype=jnp.bfloat16)

    return (a_p, x_p, w1_p, b1_p, w2_p, b2_p, s_src, s_dst), E


# ---------------------------------------------------------------------------
# Main
# ---------------------------------------------------------------------------
if __name__ == "__main__":
    key = jax.random.PRNGKey(0)
    k_x, k_e, k_el, k_w1, k_w2 = jax.random.split(key, 5)

    # Small shapes consistent with GCN(in_channels, hidden=128, out=64)
    N, F_IN, HID, OUT = 300, 16, 128, 64
    E_MSG, E_LABEL = 600, 16

    x = jax.random.normal(k_x, (N, F_IN), dtype=jnp.float32)
    edge_index = jax.random.randint(k_e, (2, E_MSG), 0, N, dtype=jnp.int32)
    # make undirected (as Planetoid + RandomLinkSplit(is_undirected=True) would)
    edge_index = jnp.concatenate(
        [edge_index, jnp.stack([edge_index[1], edge_index[0]])], axis=1)
    edge_label_index = jax.random.randint(k_el, (2, E_LABEL), 0, N, dtype=jnp.int32)

    params = {
        "w1": jax.random.normal(k_w1, (F_IN, HID), jnp.float32) * (1.0 / jnp.sqrt(F_IN)),
        "b1": jnp.zeros((1, HID), jnp.float32),
        "w2": jax.random.normal(k_w2, (HID, OUT), jnp.float32) * (1.0 / jnp.sqrt(HID)),
        "b2": jnp.zeros((1, OUT), jnp.float32),
    }

    # Static-graph preprocessing done once, outside the jitted forward.
    operands, E = preprocess(x, edge_index, edge_label_index, params)

    run = jax.jit(gcn_forward_fused)
    logits_full = jax.block_until_ready(run(*operands))
    out = logits_full[0, :E]
    assert out.shape == (E_LABEL,), out.shape

    # Reference: same math in pure JAX, mirroring the deliberate bf16 rounding
    # points of the kernel (f32 accumulation, f32 epilogues).
    def _bf(v):
        return v.astype(jnp.bfloat16).astype(jnp.float32)

    a_b = _bf(build_norm_adj(edge_index, N))
    x_b = _bf(x)
    w1_b, w2_b = _bf(params["w1"]), _bf(params["w2"])
    xw1_r = x_b @ w1_b
    h_r = jnp.maximum(a_b @ _bf(xw1_r) + params["b1"], 0.0)
    hw2_r = _bf(h_r) @ w2_b
    z_r = _bf(a_b @ _bf(hw2_r) + params["b2"])
    ref = (z_r[edge_label_index[0]] * z_r[edge_label_index[1]]).sum(-1)

    assert jnp.allclose(out, ref, atol=2e-2, rtol=2e-2), (out, ref)

    print("KERNEL_OK")
</pallas_src>

<mosaic_0001>
module attributes {stable_mosaic.version = 11 : i64} {
  func.func @gcn_fused_kernel(%arg0: memref<384x384xbf16, #tpu.memory_space<vmem>>, %arg1: memref<384x16xbf16, #tpu.memory_space<vmem>>, %arg2: memref<16x128xbf16, #tpu.memory_space<vmem>>, %arg3: memref<1x128xf32, #tpu.memory_space<vmem>>, %arg4: memref<128x64xbf16, #tpu.memory_space<vmem>>, %arg5: memref<1x64xf32, #tpu.memory_space<vmem>>, %arg6: memref<128x384xbf16, #tpu.memory_space<vmem>>, %arg7: memref<128x384xbf16, #tpu.memory_space<vmem>>, %arg8: memref<1x128xf32, #tpu.memory_space<vmem>>) attributes {dimension_semantics = [], scalar_prefetch = 0 : i64, scratch_operands = 0 : i64, tpu.core_type = #tpu.core_type<tc>} {
    %c0 = arith.constant 0 : index
    %c0_0 = arith.constant 0 : index
    %0 = vector.load %arg0[%c0, %c0_0] : memref<384x384xbf16, #tpu.memory_space<vmem>>, vector<384x384xbf16>
    %c0_1 = arith.constant 0 : index
    %c0_2 = arith.constant 0 : index
    %1 = vector.load %arg1[%c0_1, %c0_2] : memref<384x16xbf16, #tpu.memory_space<vmem>>, vector<384x16xbf16>
    %c0_3 = arith.constant 0 : index
    %c0_4 = arith.constant 0 : index
    %2 = vector.load %arg2[%c0_3, %c0_4] : memref<16x128xbf16, #tpu.memory_space<vmem>>, vector<16x128xbf16>
    %cst = arith.constant dense<0.000000e+00> : vector<384x128xf32>
    %3 = tpu.matmul %1, %2, %cst {dimension_numbers = #tpu.dot_dimension_numbers<[1], [0], [0], [1], [0, 0, 1, 1], [], []>} : vector<384x16xbf16>, vector<16x128xbf16>, vector<384x128xf32> -> vector<384x128xf32>
    %4 = arith.truncf %3 : vector<384x128xf32> to vector<384x128xbf16>
    %cst_5 = arith.constant dense<0.000000e+00> : vector<384x128xf32>
    %5 = tpu.matmul %0, %4, %cst_5 {dimension_numbers = #tpu.dot_dimension_numbers<[1], [0], [0], [1], [0, 0, 1, 1], [], []>} : vector<384x384xbf16>, vector<384x128xbf16>, vector<384x128xf32> -> vector<384x128xf32>
    %c0_6 = arith.constant 0 : index
    %c0_7 = arith.constant 0 : index
    %6 = vector.load %arg3[%c0_6, %c0_7] : memref<1x128xf32, #tpu.memory_space<vmem>>, vector<1x128xf32>
    %7 = vector.broadcast %6 : vector<1x128xf32> to vector<384x128xf32>
    %8 = arith.addf %5, %7 : vector<384x128xf32>
    %cst_8 = arith.constant 0.000000e+00 : f32
    %9 = vector.broadcast %cst_8 : f32 to vector<384x128xf32>
    %10 = arith.maximumf %8, %9 : vector<384x128xf32>
    %11 = arith.truncf %10 : vector<384x128xf32> to vector<384x128xbf16>
    %c0_9 = arith.constant 0 : index
    %c0_10 = arith.constant 0 : index
    %12 = vector.load %arg4[%c0_9, %c0_10] : memref<128x64xbf16, #tpu.memory_space<vmem>>, vector<128x64xbf16>
    %cst_11 = arith.constant dense<0.000000e+00> : vector<384x64xf32>
    %13 = tpu.matmul %11, %12, %cst_11 {dimension_numbers = #tpu.dot_dimension_numbers<[1], [0], [0], [1], [0, 0, 1, 1], [], []>} : vector<384x128xbf16>, vector<128x64xbf16>, vector<384x64xf32> -> vector<384x64xf32>
    %14 = arith.truncf %13 : vector<384x64xf32> to vector<384x64xbf16>
    %cst_12 = arith.constant dense<0.000000e+00> : vector<384x64xf32>
    %15 = tpu.matmul %0, %14, %cst_12 {dimension_numbers = #tpu.dot_dimension_numbers<[1], [0], [0], [1], [0, 0, 1, 1], [], []>} : vector<384x384xbf16>, vector<384x64xbf16>, vector<384x64xf32> -> vector<384x64xf32>
    %c0_13 = arith.constant 0 : index
    %c0_14 = arith.constant 0 : index
    %16 = vector.load %arg5[%c0_13, %c0_14] : memref<1x64xf32, #tpu.memory_space<vmem>>, vector<1x64xf32>
    %17 = vector.broadcast %16 : vector<1x64xf32> to vector<384x64xf32>
    %18 = arith.addf %15, %17 : vector<384x64xf32>
    %19 = arith.truncf %18 : vector<384x64xf32> to vector<384x64xbf16>
    %c0_15 = arith.constant 0 : index
    %c0_16 = arith.constant 0 : index
    %20 = vector.load %arg6[%c0_15, %c0_16] : memref<128x384xbf16, #tpu.memory_space<vmem>>, vector<128x384xbf16>
    %cst_17 = arith.constant dense<0.000000e+00> : vector<128x64xf32>
    %21 = tpu.matmul %20, %19, %cst_17 {dimension_numbers = #tpu.dot_dimension_numbers<[1], [0], [0], [1], [0, 0, 1, 1], [], []>} : vector<128x384xbf16>, vector<384x64xbf16>, vector<128x64xf32> -> vector<128x64xf32>
    %c0_18 = arith.constant 0 : index
    %c0_19 = arith.constant 0 : index
    %22 = vector.load %arg7[%c0_18, %c0_19] : memref<128x384xbf16, #tpu.memory_space<vmem>>, vector<128x384xbf16>
    %cst_20 = arith.constant dense<0.000000e+00> : vector<128x64xf32>
    %23 = tpu.matmul %22, %19, %cst_20 {dimension_numbers = #tpu.dot_dimension_numbers<[1], [0], [0], [1], [0, 0, 1, 1], [], []>} : vector<128x384xbf16>, vector<384x64xbf16>, vector<128x64xf32> -> vector<128x64xf32>
    %24 = arith.mulf %21, %23 : vector<128x64xf32>
    %cst_21 = arith.constant dense<0.000000e+00> : vector<128xf32>
    %25 = vector.multi_reduction <add>, %24, %cst_21 [1] : vector<128x64xf32> to vector<128xf32>
    %26 = vector.shape_cast %25 : vector<128xf32> to vector<1x128xf32>
    %c0_22 = arith.constant 0 : index
    %c0_23 = arith.constant 0 : index
    %27 = vector.load %arg8[%c0_22, %c0_23] : memref<1x128xf32, #tpu.memory_space<vmem>>, vector<1x128xf32>
    tpu.vector_store %arg8[%c0_22, %c0_23], %26 {strides = array<i32>} : memref<1x128xf32, #tpu.memory_space<vmem>>, vector<1x128xf32>,
    return
  }
}

</mosaic_0001>

<llo_original>
// kernel: gcn_forward_fused.1
$region0: #{gcn_forward_fused.1}
  #allocation0 [shape = 'u32[]', space=smem, size = 0x4, offset = 0x4, fixed_abs, tag = 'smem constant byte address 0x4 - core index']
  #allocation1 [shape = 'u32[144,128]{1,0:T(1,128)}', space=vmem, size = 0x12000, scoped, tag = 'internal scratch']
  %s0 = inlined_call_operand.hbm [shape: bf16[384,384], index: 0, kind: input, shape index: {}]
  %s1 = inlined_call_operand.vmem [shape: bf16[384,16], index: 1, kind: input, shape index: {}]
  %s2 = inlined_call_operand.vmem [shape: bf16[16,128], index: 2, kind: input, shape index: {}]
  %s3 = inlined_call_operand.vmem [shape: f32[1,128], index: 3, kind: input, shape index: {}]
  %s4 = inlined_call_operand.vmem [shape: bf16[128,64], index: 4, kind: input, shape index: {}]
  %s5 = inlined_call_operand.vmem [shape: f32[1,64], index: 5, kind: input, shape index: {}]
  %s6 = inlined_call_operand.vmem [shape: bf16[128,384], index: 6, kind: input, shape index: {}]
  %s7 = inlined_call_operand.hbm [shape: bf16[128,384], index: 7, kind: input, shape index: {}]
  %s8 = inlined_call_operand.hbm [shape: f32[1,128], index: 8, kind: output, shape index: {}]
  %s9 = sld [smem:[#allocation0]]
  $region50: #{gcn_forward_fused.1} parent=0
    _
  %s11 = ssub.s32 1, %s9
  %s12 = scalar_select 0, %s11, %s9
  $region1: #{gcn_forward_fused.1} parent=0
    #allocation2 [shape = 'u8[294912]{0}', space=vmem, size = 0x48000, scoped, tag = 'input window, operand 0, single buffered']
    #allocation3 [shape = 's32[1]{0}', space=sflag, size = 0x4, scoped, tag = 'scoped memory for gcn_forward_fused.1']
    #allocation4 [shape = 's32[1]{0}', space=sflag, size = 0x4, scoped, tag = 'scoped memory for gcn_forward_fused.1']
    #allocation5 [shape = 'u8[98304]{0}', space=vmem, size = 0x18000, scoped, tag = 'input window, operand 7, single buffered']
    #allocation6 [shape = 's32[1]{0}', space=sflag, size = 0x4, scoped, tag = 'scoped memory for gcn_forward_fused.1']
    #allocation7 [shape = 'u8[512]{0}', space=vmem, size = 0x400, scoped, tag = 'output window, operand 0, single buffered']
    %13 = vsyncpa [#allocation3], 0
    %14 = vsyncpa [#allocation6], 0
    %15 = vsyncpa [#allocation4], 0
    // Predicated region
    $region2: #{gcn_forward_fused.1} parent=1 // pred_check
      _
    $region3: #{gcn_forward_fused.1} parent=1 // pred_check_branch
      %17 = sbr.rel (0) target = $region5
    $region4: #{gcn_forward_fused.1} parent=1 // pred_region
      %s19 = ssub.s32 9216, 9216
      %20 = vsyncadd [#allocation3], %s19
      %s21 = sshll.u32 [#allocation2], 4
      %s22 = int_to_ptr.vmem [resolvable:$true] %s21
      %27 = dma.hbm_to_vmem [thread:$0]  %s0, 9216, %s22, [#allocation3], 192, 192, 12
    $region5: #{gcn_forward_fused.1} parent=1 // pred_fallthru
      _
    // Predicated region
    $region6: #{gcn_forward_fused.1} parent=1 // pred_check
      _
    $region7: #{gcn_forward_fused.1} parent=1 // pred_check_branch
      %29 = sbr.rel (0) target = $region9
    $region8: #{gcn_forward_fused.1} parent=1 // pred_region
      _
    $region9: #{gcn_forward_fused.1} parent=1 // pred_fallthru
      _
    // Predicated region
    $region10: #{gcn_forward_fused.1} parent=1 // pred_check
      _
    $region11: #{gcn_forward_fused.1} parent=1 // pred_check_branch
      %31 = sbr.rel (0) target = $region13
    $region12: #{gcn_forward_fused.1} parent=1 // pred_region
      _
    $region13: #{gcn_forward_fused.1} parent=1 // pred_fallthru
      _
    // Predicated region
    $region14: #{gcn_forward_fused.1} parent=1 // pred_check
      _
    $region15: #{gcn_forward_fused.1} parent=1 // pred_check_branch
      %33 = sbr.rel (0) target = $region17
    $region16: #{gcn_forward_fused.1} parent=1 // pred_region
      _
    $region17: #{gcn_forward_fused.1} parent=1 // pred_fallthru
      _
    // Predicated region
    $region18: #{gcn_forward_fused.1} parent=1 // pred_check
      _
    $region19: #{gcn_forward_fused.1} parent=1 // pred_check_branch
      %35 = sbr.rel (0) target = $region21
    $region20: #{gcn_forward_fused.1} parent=1 // pred_region
      _
    $region21: #{gcn_forward_fused.1} parent=1 // pred_fallthru
      _
    // Predicated region
    $region22: #{gcn_forward_fused.1} parent=1 // pred_check
      _
    $region23: #{gcn_forward_fused.1} parent=1 // pred_check_branch
      %37 = sbr.rel (0) target = $region25
    $region24: #{gcn_forward_fused.1} parent=1 // pred_region
      _
    $region25: #{gcn_forward_fused.1} parent=1 // pred_fallthru
      _
    // Predicated region
    $region26: #{gcn_forward_fused.1} parent=1 // pred_check
      _
    $region27: #{gcn_forward_fused.1} parent=1 // pred_check_branch
      %39 = sbr.rel (0) target = $region29
    $region28: #{gcn_forward_fused.1} parent=1 // pred_region
      _
    $region29: #{gcn_forward_fused.1} parent=1 // pred_fallthru
      _
    // Predicated region
    $region30: #{gcn_forward_fused.1} parent=1 // pred_check
      _
    $region31: #{gcn_forward_fused.1} parent=1 // pred_check_branch
      %41 = sbr.rel (0) target = $region33
    $region32: #{gcn_forward_fused.1} parent=1 // pred_region
      %s43 = ssub.s32 3072, 3072
      %44 = vsyncadd [#allocation6], %s43
      %s45 = sshll.u32 [#allocation5], 4
      %s46 = int_to_ptr.vmem [resolvable:$true] %s45
      %51 = dma.hbm_to_vmem [thread:$0]  %s7, 3072, %s46, [#allocation6], 192, 192, 12
    $region33: #{gcn_forward_fused.1} parent=1 // pred_fallthru
      _
    // Predicated region
    $region34: #{gcn_forward_fused.1} parent=1 // pred_check
      _
    $region35: #{gcn_forward_fused.1} parent=1 // pred_check_branch
      %53 = sbr.rel (0) target = $region37
    $region36: #{gcn_forward_fused.1} parent=1 // pred_region
      %54 = dma.done [#allocation3], 9216
    $region37: #{gcn_forward_fused.1} parent=1 // pred_fallthru
      _
    // Predicated region
    $region38: #{gcn_forward_fused.1} parent=1 // pred_check
      _
    $region39: #{gcn_forward_fused.1} parent=1 // pred_check_branch
      %56 = sbr.rel (0) target = $region41
    $region40: #{gcn_forward_fused.1} parent=1 // pred_region
      %57 = dma.done [#allocation6], 3072
    $region41: #{gcn_forward_fused.1} parent=1 // pred_fallthru
      _
    %v59 = vld [vmem:[#allocation2] sm:$0xff]
    %v60 = vld [vmem:[#allocation2 + $0x8] sm:$0xf]
    %v61 = vld [vmem:[#allocation2 + $0xc] sm:$0xff]
    %v62 = vld [vmem:[#allocation2 + $0x14] sm:$0xf]
    %v63 = vld [vmem:[#allocation2 + $0x18] sm:$0xff]
    %v64 = vld [vmem:[#allocation2 + $0x20] sm:$0xf]
    %v65 = vld [vmem:[#allocation2 + $0x24] sm:$0xff]
    %v66 = vld [vmem:[#allocation2 + $0x2c] sm:$0xf]
    %v67 = vld [vmem:[#allocation2 + $0x30] sm:$0xff]
    %v68 = vld [vmem:[#allocation2 + $0x38] sm:$0xf]
    %v69 = vld [vmem:[#allocation2 + $0x3c] sm:$0xff]
    %v70 = vld [vmem:[#allocation2 + $0x44] sm:$0xf]
    %v71 = vld [vmem:[#allocation2 + $0x48] sm:$0xff]
    %v72 = vld [vmem:[#allocation2 + $0x50] sm:$0xf]
    %v73 = vld [vmem:[#allocation2 + $0x54] sm:$0xff]
    %v74 = vld [vmem:[#allocation2 + $0x5c] sm:$0xf]
    %v75 = vld [vmem:[#allocation2 + $0x60] sm:$0xff]
    %v76 = vld [vmem:[#allocation2 + $0x68] sm:$0xf]
    %v77 = vld [vmem:[#allocation2 + $0x6c] sm:$0xff]
    %v78 = vld [vmem:[#allocation2 + $0x74] sm:$0xf]
    %v79 = vld [vmem:[#allocation2 + $0x78] sm:$0xff]
    %v80 = vld [vmem:[#allocation2 + $0x80] sm:$0xf]
    %v81 = vld [vmem:[#allocation2 + $0x84] sm:$0xff]
    %v82 = vld [vmem:[#allocation2 + $0x8c] sm:$0xf]
    %v83 = vld [vmem:[#allocation2 + $0x90] sm:$0xff]
    %v84 = vld [vmem:[#allocation2 + $0x98] sm:$0xf]
    %v85 = vld [vmem:[#allocation2 + $0x9c] sm:$0xff]
    %v86 = vld [vmem:[#allocation2 + $0xa4] sm:$0xf]
    %v87 = vld [vmem:[#allocation2 + $0xa8] sm:$0xff]
    %v88 = vld [vmem:[#allocation2 + $0xb0] sm:$0xf]
    %v89 = vld [vmem:[#allocation2 + $0xb4] sm:$0xff]
    %v90 = vld [vmem:[#allocation2 + $0xbc] sm:$0xf]
    %v91 = vld [vmem:[#allocation2 + $0xc0] sm:$0xff]
    %v92 = vld [vmem:[#allocation2 + $0xc8] sm:$0xf]
    %v93 = vld [vmem:[#allocation2 + $0xcc] sm:$0xff]
    %v94 = vld [vmem:[#allocation2 + $0xd4] sm:$0xf]
    %v95 = vld [vmem:[#allocation2 + $0xd8] sm:$0xff]
    %v96 = vld [vmem:[#allocation2 + $0xe0] sm:$0xf]
    %v97 = vld [vmem:[#allocation2 + $0xe4] sm:$0xff]
    %v98 = vld [vmem:[#allocation2 + $0xec] sm:$0xf]
    %v99 = vld [vmem:[#allocation2 + $0xf0] sm:$0xff]
    %v100 = vld [vmem:[#allocation2 + $0xf8] sm:$0xf]
    %v101 = vld [vmem:[#allocation2 + $0xfc] sm:$0xff]
    %v102 = vld [vmem:[#allocation2 + $0x104] sm:$0xf]
    %v103 = vld [vmem:[#allocation2 + $0x108] sm:$0xff]
    %v104 = vld [vmem:[#allocation2 + $0x110] sm:$0xf]
    %v105 = vld [vmem:[#allocation2 + $0x114] sm:$0xff]
    %v106 = vld [vmem:[#allocation2 + $0x11c] sm:$0xf]
    %v107 = vld [vmem:[#allocation2 + $0x120] sm:$0xff]
    %v108 = vld [vmem:[#allocation2 + $0x128] sm:$0xf]
    %v109 = vld [vmem:[#allocation2 + $0x12c] sm:$0xff]
    %v110 = vld [vmem:[#allocation2 + $0x134] sm:$0xf]
    %v111 = vld [vmem:[#allocation2 + $0x138] sm:$0xff]
    %v112 = vld [vmem:[#allocation2 + $0x140] sm:$0xf]
    %v113 = vld [vmem:[#allocation2 + $0x144] sm:$0xff]
    %v114 = vld [vmem:[#allocation2 + $0x14c] sm:$0xf]
    %v115 = vld [vmem:[#allocation2 + $0x150] sm:$0xff]
    %v116 = vld [vmem:[#allocation2 + $0x158] sm:$0xf]
    %v117 = vld [vmem:[#allocation2 + $0x15c] sm:$0xff]
    %v118 = vld [vmem:[#allocation2 + $0x164] sm:$0xf]
    %v119 = vld [vmem:[#allocation2 + $0x168] sm:$0xff]
    %v120 = vld [vmem:[#allocation2 + $0x170] sm:$0xf]
    %v121 = vld [vmem:[#allocation2 + $0x174] sm:$0xff]
    %v122 = vld [vmem:[#allocation2 + $0x17c] sm:$0xf]
    %v123 = vld [vmem:[#allocation2 + $0x180] sm:$0xff]
    %v124 = vld [vmem:[#allocation2 + $0x188] sm:$0xf]
    %v125 = vld [vmem:[#allocation2 + $0x18c] sm:$0xff]
    %v126 = vld [vmem:[#allocation2 + $0x194] sm:$0xf]
    %v127 = vld [vmem:[#allocation2 + $0x198] sm:$0xff]
    %v128 = vld [vmem:[#allocation2 + $0x1a0] sm:$0xf]
    %v129 = vld [vmem:[#allocation2 + $0x1a4] sm:$0xff]
    %v130 = vld [vmem:[#allocation2 + $0x1ac] sm:$0xf]
    %v131 = vld [vmem:[#allocation2 + $0x1b0] sm:$0xff]
    %v132 = vld [vmem:[#allocation2 + $0x1b8] sm:$0xf]
    %v133 = vld [vmem:[#allocation2 + $0x1bc] sm:$0xff]
    %v134 = vld [vmem:[#allocation2 + $0x1c4] sm:$0xf]
    %v135 = vld [vmem:[#allocation2 + $0x1c8] sm:$0xff]
    %v136 = vld [vmem:[#allocation2 + $0x1d0] sm:$0xf]
    %v137 = vld [vmem:[#allocation2 + $0x1d4] sm:$0xff]
    %v138 = vld [vmem:[#allocation2 + $0x1dc] sm:$0xf]
    %v139 = vld [vmem:[#allocation2 + $0x1e0] sm:$0xff]
    %v140 = vld [vmem:[#allocation2 + $0x1e8] sm:$0xf]
    %v141 = vld [vmem:[#allocation2 + $0x1ec] sm:$0xff]
    %v142 = vld [vmem:[#allocation2 + $0x1f4] sm:$0xf]
    %v143 = vld [vmem:[#allocation2 + $0x1f8] sm:$0xff]
    %v144 = vld [vmem:[#allocation2 + $0x200] sm:$0xf]
    %v145 = vld [vmem:[#allocation2 + $0x204] sm:$0xff]
    %v146 = vld [vmem:[#allocation2 + $0x20c] sm:$0xf]
    %v147 = vld [vmem:[#allocation2 + $0x210] sm:$0xff]
    %v148 = vld [vmem:[#allocation2 + $0x218] sm:$0xf]
    %v149 = vld [vmem:[#allocation2 + $0x21c] sm:$0xff]
    %v150 = vld [vmem:[#allocation2 + $0x224] sm:$0xf]
    %v151 = vld [vmem:[#allocation2 + $0x228] sm:$0xff]
    %v152 = vld [vmem:[#allocation2 + $0x230] sm:$0xf]
    %v153 = vld [vmem:[#allocation2 + $0x234] sm:$0xff]
    %v154 = vld [vmem:[#allocation2 + $0x23c] sm:$0xf]
    %v155 = vld [vmem:[%s1] sm:$0xf]
    %v156 = vld [vmem:[%s1 + $0x4] sm:$0xf]
    %v157 = vld [vmem:[%s1 + $0x8] sm:$0xf]
    %v158 = vld [vmem:[%s1 + $0xc] sm:$0xf]
    %v159 = vld [vmem:[%s1 + $0x10] sm:$0xf]
    %v160 = vld [vmem:[%s1 + $0x14] sm:$0xf]
    %v161 = vld [vmem:[%s1 + $0x18] sm:$0xf]
    %v162 = vld [vmem:[%s1 + $0x1c] sm:$0xf]
    %v163 = vld [vmem:[%s1 + $0x20] sm:$0xf]
    %v164 = vld [vmem:[%s1 + $0x24] sm:$0xf]
    %v165 = vld [vmem:[%s1 + $0x28] sm:$0xf]
    %v166 = vld [vmem:[%s1 + $0x2c] sm:$0xf]
    %v167 = vld [vmem:[%s1 + $0x30] sm:$0xf]
    %v168 = vld [vmem:[%s1 + $0x34] sm:$0xf]
    %v169 = vld [vmem:[%s1 + $0x38] sm:$0xf]
    %v170 = vld [vmem:[%s1 + $0x3c] sm:$0xf]
    %v171 = vld [vmem:[%s1 + $0x40] sm:$0xf]
    %v172 = vld [vmem:[%s1 + $0x44] sm:$0xf]
    %v173 = vld [vmem:[%s1 + $0x48] sm:$0xf]
    %v174 = vld [vmem:[%s1 + $0x4c] sm:$0xf]
    %v175 = vld [vmem:[%s1 + $0x50] sm:$0xf]
    %v176 = vld [vmem:[%s1 + $0x54] sm:$0xf]
    %v177 = vld [vmem:[%s1 + $0x58] sm:$0xf]
    %v178 = vld [vmem:[%s1 + $0x5c] sm:$0xf]
    %v179 = vld [vmem:[%s1 + $0x60] sm:$0xf]
    %v180 = vld [vmem:[%s1 + $0x64] sm:$0xf]
    %v181 = vld [vmem:[%s1 + $0x68] sm:$0xf]
    %v182 = vld [vmem:[%s1 + $0x6c] sm:$0xf]
    %v183 = vld [vmem:[%s1 + $0x70] sm:$0xf]
    %v184 = vld [vmem:[%s1 + $0x74] sm:$0xf]
    %v185 = vld [vmem:[%s1 + $0x78] sm:$0xf]
    %v186 = vld [vmem:[%s1 + $0x7c] sm:$0xf]
    %v187 = vld [vmem:[%s1 + $0x80] sm:$0xf]
    %v188 = vld [vmem:[%s1 + $0x84] sm:$0xf]
    %v189 = vld [vmem:[%s1 + $0x88] sm:$0xf]
    %v190 = vld [vmem:[%s1 + $0x8c] sm:$0xf]
    %v191 = vld [vmem:[%s1 + $0x90] sm:$0xf]
    %v192 = vld [vmem:[%s1 + $0x94] sm:$0xf]
    %v193 = vld [vmem:[%s1 + $0x98] sm:$0xf]
    %v194 = vld [vmem:[%s1 + $0x9c] sm:$0xf]
    %v195 = vld [vmem:[%s1 + $0xa0] sm:$0xf]
    %v196 = vld [vmem:[%s1 + $0xa4] sm:$0xf]
    %v197 = vld [vmem:[%s1 + $0xa8] sm:$0xf]
    %v198 = vld [vmem:[%s1 + $0xac] sm:$0xf]
    %v199 = vld [vmem:[%s1 + $0xb0] sm:$0xf]
    %v200 = vld [vmem:[%s1 + $0xb4] sm:$0xf]
    %v201 = vld [vmem:[%s1 + $0xb8] sm:$0xf]
    %v202 = vld [vmem:[%s1 + $0xbc] sm:$0xf]
    %v203 = vld [vmem:[%s2] sm:$0xf]
    %v204 = vld [vmem:[%s2 + $0x4] sm:$0xf]
    %v253 = vunpack.c.l.b16 %v155
    %v254 = vunpack.c.l.b16 %v156
    %v255 = vunpack.c.l.b16 %v157
    %v256 = vunpack.c.l.b16 %v158
    %v257 = vunpack.c.l.b16 %v159
    %v258 = vunpack.c.l.b16 %v160
    %v259 = vunpack.c.l.b16 %v161
    %v260 = vunpack.c.l.b16 %v162
    %v261 = vunpack.c.l.b16 %v163
    %v262 = vunpack.c.l.b16 %v164
    %v263 = vunpack.c.l.b16 %v165
    %v264 = vunpack.c.l.b16 %v166
    %v265 = vunpack.c.l.b16 %v167
    %v266 = vunpack.c.l.b16 %v168
    %v267 = vunpack.c.l.b16 %v169
    %v268 = vunpack.c.l.b16 %v170
    %v269 = vunpack.c.l.b16 %v171
    %v270 = vunpack.c.l.b16 %v172
    %v271 = vunpack.c.l.b16 %v173
    %v272 = vunpack.c.l.b16 %v174
    %v273 = vunpack.c.l.b16 %v175
    %v274 = vunpack.c.l.b16 %v176
    %v275 = vunpack.c.l.b16 %v177
    %v276 = vunpack.c.l.b16 %v178
    %v277 = vunpack.c.l.b16 %v179
    %v278 = vunpack.c.l.b16 %v180
    %v279 = vunpack.c.l.b16 %v181
    %v280 = vunpack.c.l.b16 %v182
    %v281 = vunpack.c.l.b16 %v183
    %v282 = vunpack.c.l.b16 %v184
    %v283 = vunpack.c.l.b16 %v185
    %v284 = vunpack.c.l.b16 %v186
    %v285 = vunpack.c.l.b16 %v187
    %v286 = vunpack.c.l.b16 %v188
    %v287 = vunpack.c.l.b16 %v189
    %v288 = vunpack.c.l.b16 %v190
    %v289 = vunpack.c.l.b16 %v191
    %v290 = vunpack.c.l.b16 %v192
    %v291 = vunpack.c.l.b16 %v193
    %v292 = vunpack.c.l.b16 %v194
    %v293 = vunpack.c.l.b16 %v195
    %v294 = vunpack.c.l.b16 %v196
    %v295 = vunpack.c.l.b16 %v197
    %v296 = vunpack.c.l.b16 %v198
    %v297 = vunpack.c.l.b16 %v199
    %v298 = vunpack.c.l.b16 %v200
    %v299 = vunpack.c.l.b16 %v201
    %v300 = vunpack.c.l.b16 %v202
    %v301 = vpack.c.b16 %v254, %v253
    %v302 = vpack.c.b16 %v256, %v255
    %v303 = vpack.c.b16 %v258, %v257
    %v304 = vpack.c.b16 %v260, %v259
    %v305 = vpack.c.b16 %v262, %v261
    %v306 = vpack.c.b16 %v264, %v263
    %v307 = vpack.c.b16 %v266, %v265
    %v308 = vpack.c.b16 %v268, %v267
    %v309 = vpack.c.b16 %v270, %v269
    %v310 = vpack.c.b16 %v272, %v271
    %v311 = vpack.c.b16 %v274, %v273
    %v312 = vpack.c.b16 %v276, %v275
    %v313 = vpack.c.b16 %v278, %v277
    %v314 = vpack.c.b16 %v280, %v279
    %v315 = vpack.c.b16 %v282, %v281
    %v316 = vpack.c.b16 %v284, %v283
    %v317 = vpack.c.b16 %v286, %v285
    %v318 = vpack.c.b16 %v288, %v287
    %v319 = vpack.c.b16 %v290, %v289
    %v320 = vpack.c.b16 %v292, %v291
    %v321 = vpack.c.b16 %v294, %v293
    %v322 = vpack.c.b16 %v296, %v295
    %v323 = vpack.c.b16 %v298, %v297
    %v324 = vpack.c.b16 %v300, %v299
    %v327 = vunpack.c.l.b16 %v203
    %v328 = vunpack.c.l.b16 %v204
    %v329 = vpack.c.b16 %v328, %v327
    %vm331 = vcmask 130048
    %v333 = vsel %vm331, %v301, 0
    %v336 = vsel %vm331, %v302, 0
    %v339 = vsel %vm331, %v303, 0
    %v342 = vsel %vm331, %v304, 0
    %v345 = vsel %vm331, %v305, 0
    %v348 = vsel %vm331, %v306, 0
    %v351 = vsel %vm331, %v307, 0
    %v354 = vsel %vm331, %v308, 0
    %v357 = vsel %vm331, %v309, 0
    %v360 = vsel %vm331, %v310, 0
    %v363 = vsel %vm331, %v311, 0
    %v366 = vsel %vm331, %v312, 0
    %v369 = vsel %vm331, %v313, 0
    %v372 = vsel %vm331, %v314, 0
    %v375 = vsel %vm331, %v315, 0
    %v378 = vsel %vm331, %v316, 0
    %v381 = vsel %vm331, %v317, 0
    %v384 = vsel %vm331, %v318, 0
    %v387 = vsel %vm331, %v319, 0
    %v390 = vsel %vm331, %v320, 0
    %v393 = vsel %vm331, %v321, 0
    %v396 = vsel %vm331, %v322, 0
    %v399 = vsel %vm331, %v323, 0
    %v402 = vsel %vm331, %v324, 0
    %404 = vmatprep.subr.bf16.mxu0 0
    %405 = vmatpush1.bf16.msra.mxu0 %v329
    %406 = vmatprep.subr.bf16.mxu0 0
    %407 = vmatpush1.bf16.msra.mxu0 0
    %408 = vmatprep.subr.bf16.mxu0 0
    %409 = vmatpush1.bf16.msra.mxu0 0
    %410 = vmatprep.subr.bf16.mxu0 0
    %411 = vmatpush1.bf16.msra.mxu0 0
    %412 = vmatprep.subr.bf16.mxu0 0
    %413 = vmatpush1.bf16.msra.mxu0 0
    %414 = vmatprep.subr.bf16.mxu0 0
    %415 = vmatpush1.bf16.msra.mxu0 0
    %416 = vmatprep.subr.bf16.mxu0 0
    %417 = vmatpush1.bf16.msra.mxu0 0
    %418 = vmatprep.subr.bf16.mxu0 0
    %419 = vmatpush1.bf16.msra.mxu0 0
    %420 = vmatprep.subr.bf16.mxu0 0
    %421 = vmatpush1.bf16.msra.mxu0 0
    %422 = vmatprep.subr.bf16.mxu0 0
    %423 = vmatpush1.bf16.msra.mxu0 0
    %424 = vmatprep.subr.bf16.mxu0 0
    %425 = vmatpush1.bf16.msra.mxu0 0
    %426 = vmatprep.subr.bf16.mxu0 0
    %427 = vmatpush1.bf16.msra.mxu0 0
    %428 = vmatprep.subr.bf16.mxu0 0
    %429 = vmatpush1.bf16.msra.mxu0 0
    %430 = vmatprep.subr.bf16.mxu0 0
    %431 = vmatpush1.bf16.msra.mxu0 0
    %432 = vmatprep.subr.bf16.mxu0 0
    %433 = vmatpush1.bf16.msra.mxu0 0
    %434 = vmatprep.subr.bf16.mxu0 0
    %435 = vmatpush1.bf16.msra.mxu0 0
    %436 = vmatprep.mubr.bf16.mxu0 0
    %437 = vmatmul.mubr.bf16.gmra.mrb[0].mxu0 %v333
    %v438 = vpop.f32.mrb[0].mxu0
    %v439 = vadd.f32 0.0, %v438
    %v440 = vpop.f32.mrb[0].mxu0
    %v441 = vpop.f32.mrb[0].mxu0
    %v442 = vadd.f32 0.0, %v441
    %v443 = vpop.f32.mrb[0].mxu0
    %444 = vmatprep.mubr.bf16.mxu0 0
    %445 = vmatmul.mubr.bf16.gmra.mrb[0].mxu0 %v336
    %v446 = vpop.f32.mrb[0].mxu0
    %v447 = vadd.f32 0.0, %v446
    %v448 = vpop.f32.mrb[0].mxu0
    %v449 = vpop.f32.mrb[0].mxu0
    %v450 = vadd.f32 0.0, %v449
    %v451 = vpop.f32.mrb[0].mxu0
    %452 = vmatprep.mubr.bf16.mxu0 0
    %453 = vmatmul.mubr.bf16.gmra.mrb[0].mxu0 %v339
    %v454 = vpop.f32.mrb[0].mxu0
    %v455 = vadd.f32 0.0, %v454
    %v456 = vpop.f32.mrb[0].mxu0
    %v457 = vpop.f32.mrb[0].mxu0
    %v458 = vadd.f32 0.0, %v457
    %v459 = vpop.f32.mrb[0].mxu0
    %460 = vmatprep.mubr.bf16.mxu0 0
    %461 = vmatmul.mubr.bf16.gmra.mrb[0].mxu0 %v342
    %v462 = vpop.f32.mrb[0].mxu0
    %v463 = vadd.f32 0.0, %v462
    %v464 = vpop.f32.mrb[0].mxu0
    %v465 = vpop.f32.mrb[0].mxu0
    %v466 = vadd.f32 0.0, %v465
    %v467 = vpop.f32.mrb[0].mxu0
    %468 = vmatprep.mubr.bf16.mxu0 0
    %469 = vmatmul.mubr.bf16.gmra.mrb[0].mxu0 %v345
    %v470 = vpop.f32.mrb[0].mxu0
    %v471 = vadd.f32 0.0, %v470
    %v472 = vpop.f32.mrb[0].mxu0
    %v473 = vpop.f32.mrb[0].mxu0
    %v474 = vadd.f32 0.0, %v473
    %v475 = vpop.f32.mrb[0].mxu0
    %476 = vmatprep.mubr.bf16.mxu0 0
    %477 = vmatmul.mubr.bf16.gmra.mrb[0].mxu0 %v348
    %v478 = vpop.f32.mrb[0].mxu0
    %v479 = vadd.f32 0.0, %v478
    %v480 = vpop.f32.mrb[0].mxu0
    %v481 = vpop.f32.mrb[0].mxu0
    %v482 = vadd.f32 0.0, %v481
    %v483 = vpop.f32.mrb[0].mxu0
    %484 = vmatprep.mubr.bf16.mxu0 0
    %485 = vmatmul.mubr.bf16.gmra.mrb[0].mxu0 %v351
    %v486 = vpop.f32.mrb[0].mxu0
    %v487 = vadd.f32 0.0, %v486
    %v488 = vpop.f32.mrb[0].mxu0
    %v489 = vpop.f32.mrb[0].mxu0
    %v490 = vadd.f32 0.0, %v489
    %v491 = vpop.f32.mrb[0].mxu0
    %492 = vmatprep.mubr.bf16.mxu0 0
    %493 = vmatmul.mubr.bf16.gmra.mrb[0].mxu0 %v354
    %v494 = vpop.f32.mrb[0].mxu0
    %v495 = vadd.f32 0.0, %v494
    %v496 = vpop.f32.mrb[0].mxu0
    %v497 = vpop.f32.mrb[0].mxu0
    %v498 = vadd.f32 0.0, %v497
    %v499 = vpop.f32.mrb[0].mxu0
    %500 = vmatprep.mubr.bf16.mxu0 0
    %501 = vmatmul.mubr.bf16.gmra.mrb[0].mxu0 %v357
    %v502 = vpop.f32.mrb[0].mxu0
    %v503 = vadd.f32 0.0, %v502
    %v504 = vpop.f32.mrb[0].mxu0
    %v505 = vpop.f32.mrb[0].mxu0
    %v506 = vadd.f32 0.0, %v505
    %v507 = vpop.f32.mrb[0].mxu0
    %508 = vmatprep.mubr.bf16.mxu0 0
    %509 = vmatmul.mubr.bf16.gmra.mrb[0].mxu0 %v360
    %v510 = vpop.f32.mrb[0].mxu0
    %v511 = vadd.f32 0.0, %v510
    %v512 = vpop.f32.mrb[0].mxu0
    %v513 = vpop.f32.mrb[0].mxu0
    %v514 = vadd.f32 0.0, %v513
    %v515 = vpop.f32.mrb[0].mxu0
    %516 = vmatprep.mubr.bf16.mxu0 0
    %517 = vmatmul.mubr.bf16.gmra.mrb[0].mxu0 %v363
    %v518 = vpop.f32.mrb[0].mxu0
    %v519 = vadd.f32 0.0, %v518
    %v520 = vpop.f32.mrb[0].mxu0
    %v521 = vpop.f32.mrb[0].mxu0
    %v522 = vadd.f32 0.0, %v521
    %v523 = vpop.f32.mrb[0].mxu0
    %524 = vmatprep.mubr.bf16.mxu0 0
    %525 = vmatmul.mubr.bf16.gmra.mrb[0].mxu0 %v366
    %v526 = vpop.f32.mrb[0].mxu0
    %v527 = vadd.f32 0.0, %v526
    %v528 = vpop.f32.mrb[0].mxu0
    %v529 = vpop.f32.mrb[0].mxu0
    %v530 = vadd.f32 0.0, %v529
    %v531 = vpop.f32.mrb[0].mxu0
    %532 = vmatprep.mubr.bf16.mxu0 0
    %533 = vmatmul.mubr.bf16.gmra.mrb[0].mxu0 %v369
    %v534 = vpop.f32.mrb[0].mxu0
    %v535 = vadd.f32 0.0, %v534
    %v536 = vpop.f32.mrb[0].mxu0
    %v537 = vpop.f32.mrb[0].mxu0
    %v538 = vadd.f32 0.0, %v537
    %v539 = vpop.f32.mrb[0].mxu0
    %540 = vmatprep.mubr.bf16.mxu0 0
    %541 = vmatmul.mubr.bf16.gmra.mrb[0].mxu0 %v372
    %v542 = vpop.f32.mrb[0].mxu0
    %v543 = vadd.f32 0.0, %v542
    %v544 = vpop.f32.mrb[0].mxu0
    %v545 = vpop.f32.mrb[0].mxu0
    %v546 = vadd.f32 0.0, %v545
    %v547 = vpop.f32.mrb[0].mxu0
    %548 = vmatprep.mubr.bf16.mxu0 0
    %549 = vmatmul.mubr.bf16.gmra.mrb[0].mxu0 %v375
    %v550 = vpop.f32.mrb[0].mxu0
    %v551 = vadd.f32 0.0, %v550
    %v552 = vpop.f32.mrb[0].mxu0
    %v553 = vpop.f32.mrb[0].mxu0
    %v554 = vadd.f32 0.0, %v553
    %v555 = vpop.f32.mrb[0].mxu0
    %556 = vmatprep.mubr.bf16.mxu0 0
    %557 = vmatmul.mubr.bf16.gmra.mrb[0].mxu0 %v378
    %v558 = vpop.f32.mrb[0].mxu0
    %v559 = vadd.f32 0.0, %v558
    %v560 = vpop.f32.mrb[0].mxu0
    %v561 = vpop.f32.mrb[0].mxu0
    %v562 = vadd.f32 0.0, %v561
    %v563 = vpop.f32.mrb[0].mxu0
    %564 = vmatprep.mubr.bf16.mxu0 0
    %565 = vmatmul.mubr.bf16.gmra.mrb[0].mxu0 %v381
    %v566 = vpop.f32.mrb[0].mxu0
    %v567 = vadd.f32 0.0, %v566
    %v568 = vpop.f32.mrb[0].mxu0
    %v569 = vpop.f32.mrb[0].mxu0
    %v570 = vadd.f32 0.0, %v569
    %v571 = vpop.f32.mrb[0].mxu0
    %572 = vmatprep.mubr.bf16.mxu0 0
    %573 = vmatmul.mubr.bf16.gmra.mrb[0].mxu0 %v384
    %v574 = vpop.f32.mrb[0].mxu0
    %v575 = vadd.f32 0.0, %v574
    %v576 = vpop.f32.mrb[0].mxu0
    %v577 = vpop.f32.mrb[0].mxu0
    %v578 = vadd.f32 0.0, %v577
    %v579 = vpop.f32.mrb[0].mxu0
    %580 = vmatprep.mubr.bf16.mxu0 0
    %581 = vmatmul.mubr.bf16.gmra.mrb[0].mxu0 %v387
    %v582 = vpop.f32.mrb[0].mxu0
    %v583 = vadd.f32 0.0, %v582
    %v584 = vpop.f32.mrb[0].mxu0
    %v585 = vpop.f32.mrb[0].mxu0
    %v586 = vadd.f32 0.0, %v585
    %v587 = vpop.f32.mrb[0].mxu0
    %588 = vmatprep.mubr.bf16.mxu0 0
    %589 = vmatmul.mubr.bf16.gmra.mrb[0].mxu0 %v390
    %v590 = vpop.f32.mrb[0].mxu0
    %v591 = vadd.f32 0.0, %v590
    %v592 = vpop.f32.mrb[0].mxu0
    %v593 = vpop.f32.mrb[0].mxu0
    %v594 = vadd.f32 0.0, %v593
    %v595 = vpop.f32.mrb[0].mxu0
    %596 = vmatprep.mubr.bf16.mxu0 0
    %597 = vmatmul.mubr.bf16.gmra.mrb[0].mxu0 %v393
    %v598 = vpop.f32.mrb[0].mxu0
    %v599 = vadd.f32 0.0, %v598
    %v600 = vpop.f32.mrb[0].mxu0
    %v601 = vpop.f32.mrb[0].mxu0
    %v602 = vadd.f32 0.0, %v601
    %v603 = vpop.f32.mrb[0].mxu0
    %604 = vmatprep.mubr.bf16.mxu0 0
    %605 = vmatmul.mubr.bf16.gmra.mrb[0].mxu0 %v396
    %v606 = vpop.f32.mrb[0].mxu0
    %v607 = vadd.f32 0.0, %v606
    %v608 = vpop.f32.mrb[0].mxu0
    %v609 = vpop.f32.mrb[0].mxu0
    %v610 = vadd.f32 0.0, %v609
    %v611 = vpop.f32.mrb[0].mxu0
    %612 = vmatprep.mubr.bf16.mxu0 0
    %613 = vmatmul.mubr.bf16.gmra.mrb[0].mxu0 %v399
    %v614 = vpop.f32.mrb[0].mxu0
    %v615 = vadd.f32 0.0, %v614
    %v616 = vpop.f32.mrb[0].mxu0
    %v617 = vpop.f32.mrb[0].mxu0
    %v618 = vadd.f32 0.0, %v617
    %v619 = vpop.f32.mrb[0].mxu0
    %620 = vmatprep.mubr.bf16.mxu0 0
    %621 = vmatmul.mubr.bf16.gmra.mrb[0].mxu0 %v402
    %v622 = vpop.f32.mrb[0].mxu0
    %v623 = vadd.f32 0.0, %v622
    %v624 = vpop.f32.mrb[0].mxu0
    %v625 = vpop.f32.mrb[0].mxu0
    %v626 = vadd.f32 0.0, %v625
    %v627 = vpop.f32.mrb[0].mxu0
    %628 = vdwg.mxu0
    %v629 = vpack.c.bf16 %v442, %v439
    %v630 = vpack.c.bf16 %v450, %v447
    %v631 = vpack.c.bf16 %v458, %v455
    %v632 = vpack.c.bf16 %v466, %v463
    %v633 = vpack.c.bf16 %v474, %v471
    %v634 = vpack.c.bf16 %v482, %v479
    %v635 = vpack.c.bf16 %v490, %v487
    %v636 = vpack.c.bf16 %v498, %v495
    %v637 = vpack.c.bf16 %v506, %v503
    %v638 = vpack.c.bf16 %v514, %v511
    %v639 = vpack.c.bf16 %v522, %v519
    %v640 = vpack.c.bf16 %v530, %v527
    %v641 = vpack.c.bf16 %v538, %v535
    %v642 = vpack.c.bf16 %v546, %v543
    %v643 = vpack.c.bf16 %v554, %v551
    %v644 = vpack.c.bf16 %v562, %v559
    %v645 = vpack.c.bf16 %v570, %v567
    %v646 = vpack.c.bf16 %v578, %v575
    %v647 = vpack.c.bf16 %v586, %v583
    %v648 = vpack.c.bf16 %v594, %v591
    %v649 = vpack.c.bf16 %v602, %v599
    %v650 = vpack.c.bf16 %v610, %v607
    %v651 = vpack.c.bf16 %v618, %v615
    %v652 = vpack.c.bf16 %v626, %v623
    %v653 = vld [vmem:[%s3] sm:$0x1]
    %v655 = vlaneseq
    %v656 = vshrl.u32 %v655, 7
    %v657 = vsub.s32 0, %v656
    %v658 = vrot.slane %v653, %v657
    %v756 = vunpack.c.l.b16 %v59
    %v757 = vunpack.c.h.b16 %v59
    %v758 = vunpack.c.l.b16 %v60
    %v759 = vunpack.c.l.b16 %v61
    %v760 = vunpack.c.h.b16 %v61
    %v761 = vunpack.c.l.b16 %v62
    %v762 = vunpack.c.l.b16 %v63
    %v763 = vunpack.c.h.b16 %v63
    %v764 = vunpack.c.l.b16 %v64
    %v765 = vunpack.c.l.b16 %v65
    %v766 = vunpack.c.h.b16 %v65
    %v767 = vunpack.c.l.b16 %v66
    %v768 = vunpack.c.l.b16 %v67
    %v769 = vunpack.c.h.b16 %v67
    %v770 = vunpack.c.l.b16 %v68
    %v771 = vunpack.c.l.b16 %v69
    %v772 = vunpack.c.h.b16 %v69
    %v773 = vunpack.c.l.b16 %v70
    %v774 = vunpack.c.l.b16 %v71
    %v775 = vunpack.c.h.b16 %v71
    %v776 = vunpack.c.l.b16 %v72
    %v777 = vunpack.c.l.b16 %v73
    %v778 = vunpack.c.h.b16 %v73
    %v779 = vunpack.c.l.b16 %v74
    %v780 = vunpack.c.l.b16 %v75
    %v781 = vunpack.c.h.b16 %v75
    %v782 = vunpack.c.l.b16 %v76
    %v783 = vunpack.c.l.b16 %v77
    %v784 = vunpack.c.h.b16 %v77
    %v785 = vunpack.c.l.b16 %v78
    %v786 = vunpack.c.l.b16 %v79
    %v787 = vunpack.c.h.b16 %v79
    %v788 = vunpack.c.l.b16 %v80
    %v789 = vunpack.c.l.b16 %v81
    %v790 = vunpack.c.h.b16 %v81
    %v791 = vunpack.c.l.b16 %v82
    %v792 = vunpack.c.l.b16 %v83
    %v793 = vunpack.c.h.b16 %v83
    %v794 = vunpack.c.l.b16 %v84
    %v795 = vunpack.c.l.b16 %v85
    %v796 = vunpack.c.h.b16 %v85
    %v797 = vunpack.c.l.b16 %v86
    %v798 = vunpack.c.l.b16 %v87
    %v799 = vunpack.c.h.b16 %v87
    %v800 = vunpack.c.l.b16 %v88
    %v801 = vunpack.c.l.b16 %v89
    %v802 = vunpack.c.h.b16 %v89
    %v803 = vunpack.c.l.b16 %v90
    %v804 = vunpack.c.l.b16 %v91
    %v805 = vunpack.c.h.b16 %v91
    %v806 = vunpack.c.l.b16 %v92
    %v807 = vunpack.c.l.b16 %v93
    %v808 = vunpack.c.h.b16 %v93
    %v809 = vunpack.c.l.b16 %v94
    %v810 = vunpack.c.l.b16 %v95
    %v811 = vunpack.c.h.b16 %v95
    %v812 = vunpack.c.l.b16 %v96
    %v813 = vunpack.c.l.b16 %v97
    %v814 = vunpack.c.h.b16 %v97
    %v815 = vunpack.c.l.b16 %v98
    %v816 = vunpack.c.l.b16 %v99
    %v817 = vunpack.c.h.b16 %v99
    %v818 = vunpack.c.l.b16 %v100
    %v819 = vunpack.c.l.b16 %v101
    %v820 = vunpack.c.h.b16 %v101
    %v821 = vunpack.c.l.b16 %v102
    %v822 = vunpack.c.l.b16 %v103
    %v823 = vunpack.c.h.b16 %v103
    %v824 = vunpack.c.l.b16 %v104
    %v825 = vunpack.c.l.b16 %v105
    %v826 = vunpack.c.h.b16 %v105
    %v827 = vunpack.c.l.b16 %v106
    %v828 = vunpack.c.l.b16 %v107
    %v829 = vunpack.c.h.b16 %v107
    %v830 = vunpack.c.l.b16 %v108
    %v831 = vunpack.c.l.b16 %v109
    %v832 = vunpack.c.h.b16 %v109
    %v833 = vunpack.c.l.b16 %v110
    %v834 = vunpack.c.l.b16 %v111
    %v835 = vunpack.c.h.b16 %v111
    %v836 = vunpack.c.l.b16 %v112
    %v837 = vunpack.c.l.b16 %v113
    %v838 = vunpack.c.h.b16 %v113
    %v839 = vunpack.c.l.b16 %v114
    %v840 = vunpack.c.l.b16 %v115
    %v841 = vunpack.c.h.b16 %v115
    %v842 = vunpack.c.l.b16 %v116
    %v843 = vunpack.c.l.b16 %v117
    %v844 = vunpack.c.h.b16 %v117
    %v845 = vunpack.c.l.b16 %v118
    %v846 = vunpack.c.l.b16 %v119
    %v847 = vunpack.c.h.b16 %v119
    %v848 = vunpack.c.l.b16 %v120
    %v849 = vunpack.c.l.b16 %v121
    %v850 = vunpack.c.h.b16 %v121
    %v851 = vunpack.c.l.b16 %v122
    %v852 = vunpack.c.l.b16 %v123
    %v853 = vunpack.c.h.b16 %v123
    %v854 = vunpack.c.l.b16 %v124
    %v855 = vunpack.c.l.b16 %v125
    %v856 = vunpack.c.h.b16 %v125
    %v857 = vunpack.c.l.b16 %v126
    %v858 = vunpack.c.l.b16 %v127
    %v859 = vunpack.c.h.b16 %v127
    %v860 = vunpack.c.l.b16 %v128
    %v861 = vunpack.c.l.b16 %v129
    %v862 = vunpack.c.h.b16 %v129
    %v863 = vunpack.c.l.b16 %v130
    %v864 = vunpack.c.l.b16 %v131
    %v865 = vunpack.c.h.b16 %v131
    %v866 = vunpack.c.l.b16 %v132
    %v867 = vunpack.c.l.b16 %v133
    %v868 = vunpack.c.h.b16 %v133
    %v869 = vunpack.c.l.b16 %v134
    %v870 = vunpack.c.l.b16 %v135
    %v871 = vunpack.c.h.b16 %v135
    %v872 = vunpack.c.l.b16 %v136
    %v873 = vunpack.c.l.b16 %v137
    %v874 = vunpack.c.h.b16 %v137
    %v875 = vunpack.c.l.b16 %v138
    %v876 = vunpack.c.l.b16 %v139
    %v877 = vunpack.c.h.b16 %v139
    %v878 = vunpack.c.l.b16 %v140
    %v879 = vunpack.c.l.b16 %v141
    %v880 = vunpack.c.h.b16 %v141
    %v881 = vunpack.c.l.b16 %v142
    %v882 = vunpack.c.l.b16 %v143
    %v883 = vunpack.c.h.b16 %v143
    %v884 = vunpack.c.l.b16 %v144
    %v885 = vunpack.c.l.b16 %v145
    %v886 = vunpack.c.h.b16 %v145
    %v887 = vunpack.c.l.b16 %v146
    %v888 = vunpack.c.l.b16 %v147
    %v889 = vunpack.c.h.b16 %v147
    %v890 = vunpack.c.l.b16 %v148
    %v891 = vunpack.c.l.b16 %v149
    %v892 = vunpack.c.h.b16 %v149
    %v893 = vunpack.c.l.b16 %v150
    %v894 = vunpack.c.l.b16 %v151
    %v895 = vunpack.c.h.b16 %v151
    %v896 = vunpack.c.l.b16 %v152
    %v897 = vunpack.c.l.b16 %v153
    %v898 = vunpack.c.h.b16 %v153
    %v899 = vunpack.c.l.b16 %v154
    %v900 = vpack.c.b16 %v759, %v756
    %v901 = vpack.c.b16 %v760, %v757
    %v902 = vpack.c.b16 %v761, %v758
    %v903 = vpack.c.b16 %v765, %v762
    %v904 = vpack.c.b16 %v766, %v763
    %v905 = vpack.c.b16 %v767, %v764
    %v906 = vpack.c.b16 %v771, %v768
    %v907 = vpack.c.b16 %v772, %v769
    %v908 = vpack.c.b16 %v773, %v770
    %v909 = vpack.c.b16 %v777, %v774
    %v910 = vpack.c.b16 %v778, %v775
    %v911 = vpack.c.b16 %v779, %v776
    %v912 = vpack.c.b16 %v783, %v780
    %v913 = vpack.c.b16 %v784, %v781
    %v914 = vpack.c.b16 %v785, %v782
    %v915 = vpack.c.b16 %v789, %v786
    %v916 = vpack.c.b16 %v790, %v787
    %v917 = vpack.c.b16 %v791, %v788
    %v918 = vpack.c.b16 %v795, %v792
    %v919 = vpack.c.b16 %v796, %v793
    %v920 = vpack.c.b16 %v797, %v794
    %v921 = vpack.c.b16 %v801, %v798
    %v922 = vpack.c.b16 %v802, %v799
    %v923 = vpack.c.b16 %v803, %v800
    %v924 = vpack.c.b16 %v807, %v804
    %v925 = vpack.c.b16 %v808, %v805
    %v926 = vpack.c.b16 %v809, %v806
    %v927 = vpack.c.b16 %v813, %v810
    %v928 = vpack.c.b16 %v814, %v811
    %v929 = vpack.c.b16 %v815, %v812
    %v930 = vpack.c.b16 %v819, %v816
    %v931 = vpack.c.b16 %v820, %v817
    %v932 = vpack.c.b16 %v821, %v818
    %v933 = vpack.c.b16 %v825, %v822
    %v934 = vpack.c.b16 %v826, %v823
    %v935 = vpack.c.b16 %v827, %v824
    %v936 = vpack.c.b16 %v831, %v828
    %v937 = vpack.c.b16 %v832, %v829
    %v938 = vpack.c.b16 %v833, %v830
    %v939 = vpack.c.b16 %v837, %v834
    %v940 = vpack.c.b16 %v838, %v835
    %v941 = vpack.c.b16 %v839, %v836
    %v942 = vpack.c.b16 %v843, %v840
    %v943 = vpack.c.b16 %v844, %v841
    %v944 = vpack.c.b16 %v845, %v842
    %v945 = vpack.c.b16 %v849, %v846
    %v946 = vpack.c.b16 %v850, %v847
    %v947 = vpack.c.b16 %v851, %v848
    %v948 = vpack.c.b16 %v855, %v852
    %v949 = vpack.c.b16 %v856, %v853
    %v950 = vpack.c.b16 %v857, %v854
    %v951 = vpack.c.b16 %v861, %v858
    %v952 = vpack.c.b16 %v862, %v859
    %v953 = vpack.c.b16 %v863, %v860
    %v954 = vpack.c.b16 %v867, %v864
    %v955 = vpack.c.b16 %v868, %v865
    %v956 = vpack.c.b16 %v869, %v866
    %v957 = vpack.c.b16 %v873, %v870
    %v958 = vpack.c.b16 %v874, %v871
    %v959 = vpack.c.b16 %v875, %v872
    %v960 = vpack.c.b16 %v879, %v876
    %v961 = vpack.c.b16 %v880, %v877
    %v962 = vpack.c.b16 %v881, %v878
    %v963 = vpack.c.b16 %v885, %v882
    %v964 = vpack.c.b16 %v886, %v883
    %v965 = vpack.c.b16 %v887, %v884
    %v966 = vpack.c.b16 %v891, %v888
    %v967 = vpack.c.b16 %v892, %v889
    %v968 = vpack.c.b16 %v893, %v890
    %v969 = vpack.c.b16 %v897, %v894
    %v970 = vpack.c.b16 %v898, %v895
    %v971 = vpack.c.b16 %v899, %v896
    %1044 = vmatprep.subr.bf16.mxu0 0
    %1045 = vmatpush1.bf16.msra.mxu0 %v629
    %1046 = vmatprep.subr.bf16.mxu0 0
    %1047 = vmatpush1.bf16.msra.mxu0 %v630
    %1048 = vmatprep.subr.bf16.mxu0 0
    %1049 = vmatpush1.bf16.msra.mxu0 %v631
    %1050 = vmatprep.subr.bf16.mxu0 0
    %1051 = vmatpush1.bf16.msra.mxu0 %v632
    %1052 = vmatprep.subr.bf16.mxu0 0
    %1053 = vmatpush1.bf16.msra.mxu0 %v633
    %1054 = vmatprep.subr.bf16.mxu0 0
    %1055 = vmatpush1.bf16.msra.mxu0 %v634
    %1056 = vmatprep.subr.bf16.mxu0 0
    %1057 = vmatpush1.bf16.msra.mxu0 %v635
    %1058 = vmatprep.subr.bf16.mxu0 0
    %1059 = vmatpush1.bf16.msra.mxu0 %v636
    %1060 = vmatprep.subr.bf16.mxu0 0
    %1061 = vmatpush1.bf16.msra.mxu0 %v637
    %1062 = vmatprep.subr.bf16.mxu0 0
    %1063 = vmatpush1.bf16.msra.mxu0 %v638
    %1064 = vmatprep.subr.bf16.mxu0 0
    %1065 = vmatpush1.bf16.msra.mxu0 %v639
    %1066 = vmatprep.subr.bf16.mxu0 0
    %1067 = vmatpush1.bf16.msra.mxu0 %v640
    %1068 = vmatprep.subr.bf16.mxu0 0
    %1069 = vmatpush1.bf16.msra.mxu0 %v641
    %1070 = vmatprep.subr.bf16.mxu0 0
    %1071 = vmatpush1.bf16.msra.mxu0 %v642
    %1072 = vmatprep.subr.bf16.mxu0 0
    %1073 = vmatpush1.bf16.msra.mxu0 %v643
    %1074 = vmatprep.subr.bf16.mxu0 0
    %1075 = vmatpush1.bf16.msra.mxu0 %v644
    %1076 = vmatprep.mubr.bf16.mxu0 %v901
    %1077 = vmatmul.mubr.bf16.gmra.mrb[0].mxu0 %v900
    %v1078 = vpop.f32.mrb[0].mxu0
    %v1079 = vadd.f32 %v658, %v1078
    %v1080 = vpop.f32.mrb[0].mxu0
    %v1081 = vpop.f32.mrb[0].mxu0
    %v1082 = vadd.f32 %v658, %v1081
    %v1083 = vpop.f32.mrb[0].mxu0
    %1084 = vmatprep.mubr.bf16.mxu0 %v904
    %1085 = vmatmul.mubr.bf16.gmra.mrb[0].mxu0 %v903
    %v1086 = vpop.f32.mrb[0].mxu0
    %v1087 = vadd.f32 %v658, %v1086
    %v1088 = vpop.f32.mrb[0].mxu0
    %v1089 = vpop.f32.mrb[0].mxu0
    %v1090 = vadd.f32 %v658, %v1089
    %v1091 = vpop.f32.mrb[0].mxu0
    %1092 = vmatprep.mubr.bf16.mxu0 %v907
    %1093 = vmatmul.mubr.bf16.gmra.mrb[0].mxu0 %v906
    %v1094 = vpop.f32.mrb[0].mxu0
    %v1095 = vadd.f32 %v658, %v1094
    %v1096 = vpop.f32.mrb[0].mxu0
    %v1097 = vpop.f32.mrb[0].mxu0
    %v1098 = vadd.f32 %v658, %v1097
    %v1099 = vpop.f32.mrb[0].mxu0
    %1100 = vmatprep.mubr.bf16.mxu0 %v910
    %1101 = vmatmul.mubr.bf16.gmra.mrb[0].mxu0 %v909
    %v1102 = vpop.f32.mrb[0].mxu0
    %v1103 = vadd.f32 %v658, %v1102
    %v1104 = vpop.f32.mrb[0].mxu0
    %v1105 = vpop.f32.mrb[0].mxu0
    %v1106 = vadd.f32 %v658, %v1105
    %v1107 = vpop.f32.mrb[0].mxu0
    %1108 = vmatprep.mubr.bf16.mxu0 %v913
    %1109 = vmatmul.mubr.bf16.gmra.mrb[0].mxu0 %v912
    %v1110 = vpop.f32.mrb[0].mxu0
    %v1111 = vadd.f32 %v658, %v1110
    %v1112 = vpop.f32.mrb[0].mxu0
    %v1113 = vpop.f32.mrb[0].mxu0
    %v1114 = vadd.f32 %v658, %v1113
    %v1115 = vpop.f32.mrb[0].mxu0
    %1116 = vmatprep.mubr.bf16.mxu0 %v916
    %1117 = vmatmul.mubr.bf16.gmra.mrb[0].mxu0 %v915
    %v1118 = vpop.f32.mrb[0].mxu0
    %v1119 = vadd.f32 %v658, %v1118
    %v1120 = vpop.f32.mrb[0].mxu0
    %v1121 = vpop.f32.mrb[0].mxu0
    %v1122 = vadd.f32 %v658, %v1121
    %v1123 = vpop.f32.mrb[0].mxu0
    %1124 = vmatprep.mubr.bf16.mxu0 %v919
    %1125 = vmatmul.mubr.bf16.gmra.mrb[0].mxu0 %v918
    %v1126 = vpop.f32.mrb[0].mxu0
    %v1127 = vadd.f32 %v658, %v1126
    %v1128 = vpop.f32.mrb[0].mxu0
    %v1129 = vpop.f32.mrb[0].mxu0
    %v1130 = vadd.f32 %v658, %v1129
    %v1131 = vpop.f32.mrb[0].mxu0
    %1132 = vmatprep.mubr.bf16.mxu0 %v922
    %1133 = vmatmul.mubr.bf16.gmra.mrb[0].mxu0 %v921
    %v1134 = vpop.f32.mrb[0].mxu0
    %v1135 = vadd.f32 %v658, %v1134
    %v1136 = vpop.f32.mrb[0].mxu0
    %v1137 = vpop.f32.mrb[0].mxu0
    %v1138 = vadd.f32 %v658, %v1137
    %v1139 = vpop.f32.mrb[0].mxu0
    %1140 = vmatprep.mubr.bf16.mxu0 %v925
    %1141 = vmatmul.mubr.bf16.gmra.mrb[0].mxu0 %v924
    %v1142 = vpop.f32.mrb[0].mxu0
    %v1143 = vadd.f32 %v658, %v1142
    %v1144 = vpop.f32.mrb[0].mxu0
    %v1145 = vpop.f32.mrb[0].mxu0
    %v1146 = vadd.f32 %v658, %v1145
    %v1147 = vpop.f32.mrb[0].mxu0
    %1148 = vmatprep.mubr.bf16.mxu0 %v928
    %1149 = vmatmul.mubr.bf16.gmra.mrb[0].mxu0 %v927
    %v1150 = vpop.f32.mrb[0].mxu0
    %v1151 = vadd.f32 %v658, %v1150
    %v1152 = vpop.f32.mrb[0].mxu0
    %v1153 = vpop.f32.mrb[0].mxu0
    %v1154 = vadd.f32 %v658, %v1153
    %v1155 = vpop.f32.mrb[0].mxu0
    %1156 = vmatprep.mubr.bf16.mxu0 %v931
    %1157 = vmatmul.mubr.bf16.gmra.mrb[0].mxu0 %v930
    %v1158 = vpop.f32.mrb[0].mxu0
    %v1159 = vadd.f32 %v658, %v1158
    %v1160 = vpop.f32.mrb[0].mxu0
    %v1161 = vpop.f32.mrb[0].mxu0
    %v1162 = vadd.f32 %v658, %v1161
    %v1163 = vpop.f32.mrb[0].mxu0
    %1164 = vmatprep.mubr.bf16.mxu0 %v934
    %1165 = vmatmul.mubr.bf16.gmra.mrb[0].mxu0 %v933
    %v1166 = vpop.f32.mrb[0].mxu0
    %v1167 = vadd.f32 %v658, %v1166
    %v1168 = vpop.f32.mrb[0].mxu0
    %v1169 = vpop.f32.mrb[0].mxu0
    %v1170 = vadd.f32 %v658, %v1169
    %v1171 = vpop.f32.mrb[0].mxu0
    %1172 = vmatprep.mubr.bf16.mxu0 %v937
    %1173 = vmatmul.mubr.bf16.gmra.mrb[0].mxu0 %v936
    %v1174 = vpop.f32.mrb[0].mxu0
    %v1175 = vadd.f32 %v658, %v1174
    %v1176 = vpop.f32.mrb[0].mxu0
    %v1177 = vpop.f32.mrb[0].mxu0
    %v1178 = vadd.f32 %v658, %v1177
    %v1179 = vpop.f32.mrb[0].mxu0
    %1180 = vmatprep.mubr.bf16.mxu0 %v940
    %1181 = vmatmul.mubr.bf16.gmra.mrb[0].mxu0 %v939
    %v1182 = vpop.f32.mrb[0].mxu0
    %v1183 = vadd.f32 %v658, %v1182
    %v1184 = vpop.f32.mrb[0].mxu0
    %v1185 = vpop.f32.mrb[0].mxu0
    %v1186 = vadd.f32 %v658, %v1185
    %v1187 = vpop.f32.mrb[0].mxu0
    %1188 = vmatprep.mubr.bf16.mxu0 %v943
    %1189 = vmatmul.mubr.bf16.gmra.mrb[0].mxu0 %v942
    %v1190 = vpop.f32.mrb[0].mxu0
    %v1191 = vadd.f32 %v658, %v1190
    %v1192 = vpop.f32.mrb[0].mxu0
    %v1193 = vpop.f32.mrb[0].mxu0
    %v1194 = vadd.f32 %v658, %v1193
    %v1195 = vpop.f32.mrb[0].mxu0
    %1196 = vmatprep.mubr.bf16.mxu0 %v946
    %1197 = vmatmul.mubr.bf16.gmra.mrb[0].mxu0 %v945
    %v1198 = vpop.f32.mrb[0].mxu0
    %v1199 = vadd.f32 %v658, %v1198
    %v1200 = vpop.f32.mrb[0].mxu0
    %v1201 = vpop.f32.mrb[0].mxu0
    %v1202 = vadd.f32 %v658, %v1201
    %v1203 = vpop.f32.mrb[0].mxu0
    %1204 = vmatprep.mubr.bf16.mxu0 %v949
    %1205 = vmatmul.mubr.bf16.gmra.mrb[0].mxu0 %v948
    %v1206 = vpop.f32.mrb[0].mxu0
    %v1207 = vadd.f32 %v658, %v1206
    %v1208 = vpop.f32.mrb[0].mxu0
    %v1209 = vpop.f32.mrb[0].mxu0
    %v1210 = vadd.f32 %v658, %v1209
    %v1211 = vpop.f32.mrb[0].mxu0
    %1212 = vmatprep.mubr.bf16.mxu0 %v952
    %1213 = vmatmul.mubr.bf16.gmra.mrb[0].mxu0 %v951
    %v1214 = vpop.f32.mrb[0].mxu0
    %v1215 = vadd.f32 %v658, %v1214
    %v1216 = vpop.f32.mrb[0].mxu0
    %v1217 = vpop.f32.mrb[0].mxu0
    %v1218 = vadd.f32 %v658, %v1217
    %v1219 = vpop.f32.mrb[0].mxu0
    %1220 = vmatprep.mubr.bf16.mxu0 %v955
    %1221 = vmatmul.mubr.bf16.gmra.mrb[0].mxu0 %v954
    %v1222 = vpop.f32.mrb[0].mxu0
    %v1223 = vadd.f32 %v658, %v1222
    %v1224 = vpop.f32.mrb[0].mxu0
    %v1225 = vpop.f32.mrb[0].mxu0
    %v1226 = vadd.f32 %v658, %v1225
    %v1227 = vpop.f32.mrb[0].mxu0
    %1228 = vmatprep.mubr.bf16.mxu0 %v958
    %1229 = vmatmul.mubr.bf16.gmra.mrb[0].mxu0 %v957
    %v1230 = vpop.f32.mrb[0].mxu0
    %v1231 = vadd.f32 %v658, %v1230
    %v1232 = vpop.f32.mrb[0].mxu0
    %v1233 = vpop.f32.mrb[0].mxu0
    %v1234 = vadd.f32 %v658, %v1233
    %v1235 = vpop.f32.mrb[0].mxu0
    %1236 = vmatprep.mubr.bf16.mxu0 %v961
    %1237 = vmatmul.mubr.bf16.gmra.mrb[0].mxu0 %v960
    %v1238 = vpop.f32.mrb[0].mxu0
    %v1239 = vadd.f32 %v658, %v1238
    %v1240 = vpop.f32.mrb[0].mxu0
    %v1241 = vpop.f32.mrb[0].mxu0
    %v1242 = vadd.f32 %v658, %v1241
    %v1243 = vpop.f32.mrb[0].mxu0
    %1244 = vmatprep.mubr.bf16.mxu0 %v964
    %1245 = vmatmul.mubr.bf16.gmra.mrb[0].mxu0 %v963
    %v1246 = vpop.f32.mrb[0].mxu0
    %v1247 = vadd.f32 %v658, %v1246
    %v1248 = vpop.f32.mrb[0].mxu0
    %v1249 = vpop.f32.mrb[0].mxu0
    %v1250 = vadd.f32 %v658, %v1249
    %v1251 = vpop.f32.mrb[0].mxu0
    %1252 = vmatprep.mubr.bf16.mxu0 %v967
    %1253 = vmatmul.mubr.bf16.gmra.mrb[0].mxu0 %v966
    %v1254 = vpop.f32.mrb[0].mxu0
    %v1255 = vadd.f32 %v658, %v1254
    %v1256 = vpop.f32.mrb[0].mxu0
    %v1257 = vpop.f32.mrb[0].mxu0
    %v1258 = vadd.f32 %v658, %v1257
    %v1259 = vpop.f32.mrb[0].mxu0
    %1260 = vmatprep.mubr.bf16.mxu0 %v970
    %1261 = vmatmul.mubr.bf16.gmra.mrb[0].mxu0 %v969
    %v1262 = vpop.f32.mrb[0].mxu0
    %v1263 = vadd.f32 %v658, %v1262
    %v1264 = vpop.f32.mrb[0].mxu0
    %v1265 = vpop.f32.mrb[0].mxu0
    %v1266 = vadd.f32 %v658, %v1265
    %v1267 = vpop.f32.mrb[0].mxu0
    %1268 = vdwg.mxu0
    %1269 = vmatprep.subr.bf16.mxu0 0
    %1270 = vmatpush1.bf16.msra.mxu0 %v645
    %1271 = vmatprep.subr.bf16.mxu0 0
    %1272 = vmatpush1.bf16.msra.mxu0 %v646
    %1273 = vmatprep.subr.bf16.mxu0 0
    %1274 = vmatpush1.bf16.msra.mxu0 %v647
    %1275 = vmatprep.subr.bf16.mxu0 0
    %1276 = vmatpush1.bf16.msra.mxu0 %v648
    %1277 = vmatprep.subr.bf16.mxu0 0
    %1278 = vmatpush1.bf16.msra.mxu0 %v649
    %1279 = vmatprep.subr.bf16.mxu0 0
    %1280 = vmatpush1.bf16.msra.mxu0 %v650
    %1281 = vmatprep.subr.bf16.mxu0 0
    %1282 = vmatpush1.bf16.msra.mxu0 %v651
    %1283 = vmatprep.subr.bf16.mxu0 0
    %1284 = vmatpush1.bf16.msra.mxu0 %v652
    %1285 = vmatprep.subr.bf16.mxu0 0
    %1286 = vmatpush1.bf16.msra.mxu0 0
    %1287 = vmatprep.subr.bf16.mxu0 0
    %1288 = vmatpush1.bf16.msra.mxu0 0
    %1289 = vmatprep.subr.bf16.mxu0 0
    %1290 = vmatpush1.bf16.msra.mxu0 0
    %1291 = vmatprep.subr.bf16.mxu0 0
    %1292 = vmatpush1.bf16.msra.mxu0 0
    %1293 = vmatprep.subr.bf16.mxu0 0
    %1294 = vmatpush1.bf16.msra.mxu0 0
    %1295 = vmatprep.subr.bf16.mxu0 0
    %1296 = vmatpush1.bf16.msra.mxu0 0
    %1297 = vmatprep.subr.bf16.mxu0 0
    %1298 = vmatpush1.bf16.msra.mxu0 0
    %1299 = vmatprep.subr.bf16.mxu0 0
    %1300 = vmatpush1.bf16.msra.mxu0 0
    %1301 = vmatprep.mubr.bf16.mxu0 0
    %1302 = vmatmul.mubr.bf16.gmra.mrb[0].mxu0 %v902
    %v1303 = vpop.f32.mrb[0].mxu0
    %v1304 = vadd.f32 %v1079, %v1303
    %v1305 = vpop.f32.mrb[0].mxu0
    %v1306 = vpop.f32.mrb[0].mxu0
    %v1307 = vadd.f32 %v1082, %v1306
    %v1308 = vpop.f32.mrb[0].mxu0
    %1309 = vmatprep.mubr.bf16.mxu0 0
    %1310 = vmatmul.mubr.bf16.gmra.mrb[0].mxu0 %v905
    %v1311 = vpop.f32.mrb[0].mxu0
    %v1312 = vadd.f32 %v1087, %v1311
    %v1313 = vpop.f32.mrb[0].mxu0
    %v1314 = vpop.f32.mrb[0].mxu0
    %v1315 = vadd.f32 %v1090, %v1314
    %v1316 = vpop.f32.mrb[0].mxu0
    %1317 = vmatprep.mubr.bf16.mxu0 0
    %1318 = vmatmul.mubr.bf16.gmra.mrb[0].mxu0 %v908
    %v1319 = vpop.f32.mrb[0].mxu0
    %v1320 = vadd.f32 %v1095, %v1319
    %v1321 = vpop.f32.mrb[0].mxu0
    %v1322 = vpop.f32.mrb[0].mxu0
    %v1323 = vadd.f32 %v1098, %v1322
    %v1324 = vpop.f32.mrb[0].mxu0
    %1325 = vmatprep.mubr.bf16.mxu0 0
    %1326 = vmatmul.mubr.bf16.gmra.mrb[0].mxu0 %v911
    %v1327 = vpop.f32.mrb[0].mxu0
    %v1328 = vadd.f32 %v1103, %v1327
    %v1329 = vpop.f32.mrb[0].mxu0
    %v1330 = vpop.f32.mrb[0].mxu0
    %v1331 = vadd.f32 %v1106, %v1330
    %v1332 = vpop.f32.mrb[0].mxu0
    %1333 = vmatprep.mubr.bf16.mxu0 0
    %1334 = vmatmul.mubr.bf16.gmra.mrb[0].mxu0 %v914
    %v1335 = vpop.f32.mrb[0].mxu0
    %v1336 = vadd.f32 %v1111, %v1335
    %v1337 = vpop.f32.mrb[0].mxu0
    %v1338 = vpop.f32.mrb[0].mxu0
    %v1339 = vadd.f32 %v1114, %v1338
    %v1340 = vpop.f32.mrb[0].mxu0
    %1341 = vmatprep.mubr.bf16.mxu0 0
    %1342 = vmatmul.mubr.bf16.gmra.mrb[0].mxu0 %v917
    %v1343 = vpop.f32.mrb[0].mxu0
    %v1344 = vadd.f32 %v1119, %v1343
    %v1345 = vpop.f32.mrb[0].mxu0
    %v1346 = vpop.f32.mrb[0].mxu0
    %v1347 = vadd.f32 %v1122, %v1346
    %v1348 = vpop.f32.mrb[0].mxu0
    %1349 = vmatprep.mubr.bf16.mxu0 0
    %1350 = vmatmul.mubr.bf16.gmra.mrb[0].mxu0 %v920
    %v1351 = vpop.f32.mrb[0].mxu0
    %v1352 = vadd.f32 %v1127, %v1351
    %v1353 = vpop.f32.mrb[0].mxu0
    %v1354 = vpop.f32.mrb[0].mxu0
    %v1355 = vadd.f32 %v1130, %v1354
    %v1356 = vpop.f32.mrb[0].mxu0
    %1357 = vmatprep.mubr.bf16.mxu0 0
    %1358 = vmatmul.mubr.bf16.gmra.mrb[0].mxu0 %v923
    %v1359 = vpop.f32.mrb[0].mxu0
    %v1360 = vadd.f32 %v1135, %v1359
    %v1361 = vpop.f32.mrb[0].mxu0
    %v1362 = vpop.f32.mrb[0].mxu0
    %v1363 = vadd.f32 %v1138, %v1362
    %v1364 = vpop.f32.mrb[0].mxu0
    %1365 = vmatprep.mubr.bf16.mxu0 0
    %1366 = vmatmul.mubr.bf16.gmra.mrb[0].mxu0 %v926
    %v1367 = vpop.f32.mrb[0].mxu0
    %v1368 = vadd.f32 %v1143, %v1367
    %v1369 = vpop.f32.mrb[0].mxu0
    %v1370 = vpop.f32.mrb[0].mxu0
    %v1371 = vadd.f32 %v1146, %v1370
    %v1372 = vpop.f32.mrb[0].mxu0
    %1373 = vmatprep.mubr.bf16.mxu0 0
    %1374 = vmatmul.mubr.bf16.gmra.mrb[0].mxu0 %v929
    %v1375 = vpop.f32.mrb[0].mxu0
    %v1376 = vadd.f32 %v1151, %v1375
    %v1377 = vpop.f32.mrb[0].mxu0
    %v1378 = vpop.f32.mrb[0].mxu0
    %v1379 = vadd.f32 %v1154, %v1378
    %v1380 = vpop.f32.mrb[0].mxu0
    %1381 = vmatprep.mubr.bf16.mxu0 0
    %1382 = vmatmul.mubr.bf16.gmra.mrb[0].mxu0 %v932
    %v1383 = vpop.f32.mrb[0].mxu0
    %v1384 = vadd.f32 %v1159, %v1383
    %v1385 = vpop.f32.mrb[0].mxu0
    %v1386 = vpop.f32.mrb[0].mxu0
    %v1387 = vadd.f32 %v1162, %v1386
    %v1388 = vpop.f32.mrb[0].mxu0
    %1389 = vmatprep.mubr.bf16.mxu0 0
    %1390 = vmatmul.mubr.bf16.gmra.mrb[0].mxu0 %v935
    %v1391 = vpop.f32.mrb[0].mxu0
    %v1392 = vadd.f32 %v1167, %v1391
    %v1393 = vpop.f32.mrb[0].mxu0
    %v1394 = vpop.f32.mrb[0].mxu0
    %v1395 = vadd.f32 %v1170, %v1394
    %v1396 = vpop.f32.mrb[0].mxu0
    %1397 = vmatprep.mubr.bf16.mxu0 0
    %1398 = vmatmul.mubr.bf16.gmra.mrb[0].mxu0 %v938
    %v1399 = vpop.f32.mrb[0].mxu0
    %v1400 = vadd.f32 %v1175, %v1399
    %v1401 = vpop.f32.mrb[0].mxu0
    %v1402 = vpop.f32.mrb[0].mxu0
    %v1403 = vadd.f32 %v1178, %v1402
    %v1404 = vpop.f32.mrb[0].mxu0
    %1405 = vmatprep.mubr.bf16.mxu0 0
    %1406 = vmatmul.mubr.bf16.gmra.mrb[0].mxu0 %v941
    %v1407 = vpop.f32.mrb[0].mxu0
    %v1408 = vadd.f32 %v1183, %v1407
    %v1409 = vpop.f32.mrb[0].mxu0
    %v1410 = vpop.f32.mrb[0].mxu0
    %v1411 = vadd.f32 %v1186, %v1410
    %v1412 = vpop.f32.mrb[0].mxu0
    %1413 = vmatprep.mubr.bf16.mxu0 0
    %1414 = vmatmul.mubr.bf16.gmra.mrb[0].mxu0 %v944
    %v1415 = vpop.f32.mrb[0].mxu0
    %v1416 = vadd.f32 %v1191, %v1415
    %v1417 = vpop.f32.mrb[0].mxu0
    %v1418 = vpop.f32.mrb[0].mxu0
    %v1419 = vadd.f32 %v1194, %v1418
    %v1420 = vpop.f32.mrb[0].mxu0
    %1421 = vmatprep.mubr.bf16.mxu0 0
    %1422 = vmatmul.mubr.bf16.gmra.mrb[0].mxu0 %v947
    %v1423 = vpop.f32.mrb[0].mxu0
    %v1424 = vadd.f32 %v1199, %v1423
    %v1425 = vpop.f32.mrb[0].mxu0
    %v1426 = vpop.f32.mrb[0].mxu0
    %v1427 = vadd.f32 %v1202, %v1426
    %v1428 = vpop.f32.mrb[0].mxu0
    %1429 = vmatprep.mubr.bf16.mxu0 0
    %1430 = vmatmul.mubr.bf16.gmra.mrb[0].mxu0 %v950
    %v1431 = vpop.f32.mrb[0].mxu0
    %v1432 = vadd.f32 %v1207, %v1431
    %v1433 = vpop.f32.mrb[0].mxu0
    %v1434 = vpop.f32.mrb[0].mxu0
    %v1435 = vadd.f32 %v1210, %v1434
    %v1436 = vpop.f32.mrb[0].mxu0
    %1437 = vmatprep.mubr.bf16.mxu0 0
    %1438 = vmatmul.mubr.bf16.gmra.mrb[0].mxu0 %v953
    %v1439 = vpop.f32.mrb[0].mxu0
    %v1440 = vadd.f32 %v1215, %v1439
    %v1441 = vpop.f32.mrb[0].mxu0
    %v1442 = vpop.f32.mrb[0].mxu0
    %v1443 = vadd.f32 %v1218, %v1442
    %v1444 = vpop.f32.mrb[0].mxu0
    %1445 = vmatprep.mubr.bf16.mxu0 0
    %1446 = vmatmul.mubr.bf16.gmra.mrb[0].mxu0 %v956
    %v1447 = vpop.f32.mrb[0].mxu0
    %v1448 = vadd.f32 %v1223, %v1447
    %v1449 = vpop.f32.mrb[0].mxu0
    %v1450 = vpop.f32.mrb[0].mxu0
    %v1451 = vadd.f32 %v1226, %v1450
    %v1452 = vpop.f32.mrb[0].mxu0
    %1453 = vmatprep.mubr.bf16.mxu0 0
    %1454 = vmatmul.mubr.bf16.gmra.mrb[0].mxu0 %v959
    %v1455 = vpop.f32.mrb[0].mxu0
    %v1456 = vadd.f32 %v1231, %v1455
    %v1457 = vpop.f32.mrb[0].mxu0
    %v1458 = vpop.f32.mrb[0].mxu0
    %v1459 = vadd.f32 %v1234, %v1458
    %v1460 = vpop.f32.mrb[0].mxu0
    %1461 = vmatprep.mubr.bf16.mxu0 0
    %1462 = vmatmul.mubr.bf16.gmra.mrb[0].mxu0 %v962
    %v1463 = vpop.f32.mrb[0].mxu0
    %v1464 = vadd.f32 %v1239, %v1463
    %v1465 = vpop.f32.mrb[0].mxu0
    %v1466 = vpop.f32.mrb[0].mxu0
    %v1467 = vadd.f32 %v1242, %v1466
    %v1468 = vpop.f32.mrb[0].mxu0
    %1469 = vmatprep.mubr.bf16.mxu0 0
    %1470 = vmatmul.mubr.bf16.gmra.mrb[0].mxu0 %v965
    %v1471 = vpop.f32.mrb[0].mxu0
    %v1472 = vadd.f32 %v1247, %v1471
    %v1473 = vpop.f32.mrb[0].mxu0
    %v1474 = vpop.f32.mrb[0].mxu0
    %v1475 = vadd.f32 %v1250, %v1474
    %v1476 = vpop.f32.mrb[0].mxu0
    %1477 = vmatprep.mubr.bf16.mxu0 0
    %1478 = vmatmul.mubr.bf16.gmra.mrb[0].mxu0 %v968
    %v1479 = vpop.f32.mrb[0].mxu0
    %v1480 = vadd.f32 %v1255, %v1479
    %v1481 = vpop.f32.mrb[0].mxu0
    %v1482 = vpop.f32.mrb[0].mxu0
    %v1483 = vadd.f32 %v1258, %v1482
    %v1484 = vpop.f32.mrb[0].mxu0
    %1485 = vmatprep.mubr.bf16.mxu0 0
    %1486 = vmatmul.mubr.bf16.gmra.mrb[0].mxu0 %v971
    %v1487 = vpop.f32.mrb[0].mxu0
    %v1488 = vadd.f32 %v1263, %v1487
    %v1489 = vpop.f32.mrb[0].mxu0
    %v1490 = vpop.f32.mrb[0].mxu0
    %v1491 = vadd.f32 %v1266, %v1490
    %v1492 = vpop.f32.mrb[0].mxu0
    %1493 = vdwg.mxu0
    %v1494 = vmax.f32 %v1304, 0.0
    %v1495 = vmax.f32 %v1307, 0.0
    %v1496 = vmax.f32 %v1312, 0.0
    %v1497 = vmax.f32 %v1315, 0.0
    %v1498 = vmax.f32 %v1320, 0.0
    %v1499 = vmax.f32 %v1323, 0.0
    %v1500 = vmax.f32 %v1328, 0.0
    %v1501 = vmax.f32 %v1331, 0.0
    %v1502 = vmax.f32 %v1336, 0.0
    %v1503 = vmax.f32 %v1339, 0.0
    %v1504 = vmax.f32 %v1344, 0.0
    %v1505 = vmax.f32 %v1347, 0.0
    %v1506 = vmax.f32 %v1352, 0.0
    %v1507 = vmax.f32 %v1355, 0.0
    %v1508 = vmax.f32 %v1360, 0.0
    %v1509 = vmax.f32 %v1363, 0.0
    %v1510 = vmax.f32 %v1368, 0.0
    %v1511 = vmax.f32 %v1371, 0.0
    %v1512 = vmax.f32 %v1376, 0.0
    %v1513 = vmax.f32 %v1379, 0.0
    %v1514 = vmax.f32 %v1384, 0.0
    %v1515 = vmax.f32 %v1387, 0.0
    %v1516 = vmax.f32 %v1392, 0.0
    %v1517 = vmax.f32 %v1395, 0.0
    %v1518 = vmax.f32 %v1400, 0.0
    %v1519 = vmax.f32 %v1403, 0.0
    %v1520 = vmax.f32 %v1408, 0.0
    %v1521 = vmax.f32 %v1411, 0.0
    %v1522 = vmax.f32 %v1416, 0.0
    %v1523 = vmax.f32 %v1419, 0.0
    %v1524 = vmax.f32 %v1424, 0.0
    %v1525 = vmax.f32 %v1427, 0.0
    %v1526 = vmax.f32 %v1432, 0.0
    %v1527 = vmax.f32 %v1435, 0.0
    %v1528 = vmax.f32 %v1440, 0.0
    %v1529 = vmax.f32 %v1443, 0.0
    %v1530 = vmax.f32 %v1448, 0.0
    %v1531 = vmax.f32 %v1451, 0.0
    %v1532 = vmax.f32 %v1456, 0.0
    %v1533 = vmax.f32 %v1459, 0.0
    %v1534 = vmax.f32 %v1464, 0.0
    %v1535 = vmax.f32 %v1467, 0.0
    %v1536 = vmax.f32 %v1472, 0.0
    %v1537 = vmax.f32 %v1475, 0.0
    %v1538 = vmax.f32 %v1480, 0.0
    %v1539 = vmax.f32 %v1483, 0.0
    %v1540 = vmax.f32 %v1488, 0.0
    %v1541 = vmax.f32 %v1491, 0.0
    %v1542 = vpack.c.bf16 %v1495, %v1494
    %v1543 = vpack.c.bf16 %v1497, %v1496
    %v1544 = vpack.c.bf16 %v1499, %v1498
    %v1545 = vpack.c.bf16 %v1501, %v1500
    %v1546 = vpack.c.bf16 %v1503, %v1502
    %v1547 = vpack.c.bf16 %v1505, %v1504
    %v1548 = vpack.c.bf16 %v1507, %v1506
    %v1549 = vpack.c.bf16 %v1509, %v1508
    %v1550 = vpack.c.bf16 %v1511, %v1510
    %v1551 = vpack.c.bf16 %v1513, %v1512
    %v1552 = vpack.c.bf16 %v1515, %v1514
    %v1553 = vpack.c.bf16 %v1517, %v1516
    %v1554 = vpack.c.bf16 %v1519, %v1518
    %v1555 = vpack.c.bf16 %v1521, %v1520
    %v1556 = vpack.c.bf16 %v1523, %v1522
    %v1557 = vpack.c.bf16 %v1525, %v1524
    %v1558 = vpack.c.bf16 %v1527, %v1526
    %v1559 = vpack.c.bf16 %v1529, %v1528
    %v1560 = vpack.c.bf16 %v1531, %v1530
    %v1561 = vpack.c.bf16 %v1533, %v1532
    %v1562 = vpack.c.bf16 %v1535, %v1534
    %v1563 = vpack.c.bf16 %v1537, %v1536
    %v1564 = vpack.c.bf16 %v1539, %v1538
    %v1565 = vpack.c.bf16 %v1541, %v1540
    %v1566 = vld [vmem:[%s4] sm:$0xf]
    %v1567 = vld [vmem:[%s4 + $0x4] sm:$0xf]
    %v1568 = vld [vmem:[%s4 + $0x8] sm:$0xf]
    %v1569 = vld [vmem:[%s4 + $0xc] sm:$0xf]
    %v1570 = vld [vmem:[%s4 + $0x10] sm:$0xf]
    %v1571 = vld [vmem:[%s4 + $0x14] sm:$0xf]
    %v1572 = vld [vmem:[%s4 + $0x18] sm:$0xf]
    %v1573 = vld [vmem:[%s4 + $0x1c] sm:$0xf]
    %v1574 = vld [vmem:[%s4 + $0x20] sm:$0xf]
    %v1575 = vld [vmem:[%s4 + $0x24] sm:$0xf]
    %v1576 = vld [vmem:[%s4 + $0x28] sm:$0xf]
    %v1577 = vld [vmem:[%s4 + $0x2c] sm:$0xf]
    %v1578 = vld [vmem:[%s4 + $0x30] sm:$0xf]
    %v1579 = vld [vmem:[%s4 + $0x34] sm:$0xf]
    %v1580 = vld [vmem:[%s4 + $0x38] sm:$0xf]
    %v1581 = vld [vmem:[%s4 + $0x3c] sm:$0xf]
    %v1598 = vunpack.c.l.b16 %v1566
    %v1599 = vunpack.c.l.b16 %v1567
    %v1600 = vunpack.c.l.b16 %v1568
    %v1601 = vunpack.c.l.b16 %v1569
    %v1602 = vunpack.c.l.b16 %v1570
    %v1603 = vunpack.c.l.b16 %v1571
    %v1604 = vunpack.c.l.b16 %v1572
    %v1605 = vunpack.c.l.b16 %v1573
    %v1606 = vunpack.c.l.b16 %v1574
    %v1607 = vunpack.c.l.b16 %v1575
    %v1608 = vunpack.c.l.b16 %v1576
    %v1609 = vunpack.c.l.b16 %v1577
    %v1610 = vunpack.c.l.b16 %v1578
    %v1611 = vunpack.c.l.b16 %v1579
    %v1612 = vunpack.c.l.b16 %v1580
    %v1613 = vunpack.c.l.b16 %v1581
    %v1614 = vpack.c.b16 %v1599, %v1598
    %v1615 = vpack.c.b16 %v1601, %v1600
    %v1616 = vpack.c.b16 %v1603, %v1602
    %v1617 = vpack.c.b16 %v1605, %v1604
    %v1618 = vpack.c.b16 %v1607, %v1606
    %v1619 = vpack.c.b16 %v1609, %v1608
    %v1620 = vpack.c.b16 %v1611, %v1610
    %v1621 = vpack.c.b16 %v1613, %v1612
    %1630 = vmatprep.subr.bf16.mxu0 0
    %1631 = vmatpush1.bf16.msra.mxu0 %v1614
    %1632 = vmatprep.subr.bf16.mxu0 0
    %1633 = vmatpush1.bf16.msra.mxu0 %v1615
    %1634 = vmatprep.subr.bf16.mxu0 0
    %1635 = vmatpush1.bf16.msra.mxu0 %v1616
    %1636 = vmatprep.subr.bf16.mxu0 0
    %1637 = vmatpush1.bf16.msra.mxu0 %v1617
    %1638 = vmatprep.subr.bf16.mxu0 0
    %1639 = vmatpush1.bf16.msra.mxu0 %v1618
    %1640 = vmatprep.subr.bf16.mxu0 0
    %1641 = vmatpush1.bf16.msra.mxu0 %v1619
    %1642 = vmatprep.subr.bf16.mxu0 0
    %1643 = vmatpush1.bf16.msra.mxu0 %v1620
    %1644 = vmatprep.subr.bf16.mxu0 0
    %1645 = vmatpush1.bf16.msra.mxu0 %v1621
    %1646 = vmatprep.subr.bf16.mxu0 0
    %1647 = vmatpush1.bf16.msra.mxu0 0
    %1648 = vmatprep.subr.bf16.mxu0 0
    %1649 = vmatpush1.bf16.msra.mxu0 0
    %1650 = vmatprep.subr.bf16.mxu0 0
    %1651 = vmatpush1.bf16.msra.mxu0 0
    %1652 = vmatprep.subr.bf16.mxu0 0
    %1653 = vmatpush1.bf16.msra.mxu0 0
    %1654 = vmatprep.subr.bf16.mxu0 0
    %1655 = vmatpush1.bf16.msra.mxu0 0
    %1656 = vmatprep.subr.bf16.mxu0 0
    %1657 = vmatpush1.bf16.msra.mxu0 0
    %1658 = vmatprep.subr.bf16.mxu0 0
    %1659 = vmatpush1.bf16.msra.mxu0 0
    %1660 = vmatprep.subr.bf16.mxu0 0
    %1661 = vmatpush1.bf16.msra.mxu0 0
    %1662 = vmatprep.mubr.bf16.mxu0 0
    %1663 = vmatmul.mubr.bf16.gmra.mrb[0].mxu0 %v1542
    %v1664 = vpop.f32.mrb[0].mxu0
    %v1665 = vadd.f32 0.0, %v1664
    %v1666 = vpop.f32.mrb[0].mxu0
    %v1667 = vpop.f32.mrb[0].mxu0
    %v1668 = vadd.f32 0.0, %v1667
    %v1669 = vpop.f32.mrb[0].mxu0
    %1670 = vmatprep.mubr.bf16.mxu0 0
    %1671 = vmatmul.mubr.bf16.gmra.mrb[0].mxu0 %v1543
    %v1672 = vpop.f32.mrb[0].mxu0
    %v1673 = vadd.f32 0.0, %v1672
    %v1674 = vpop.f32.mrb[0].mxu0
    %v1675 = vpop.f32.mrb[0].mxu0
    %v1676 = vadd.f32 0.0, %v1675
    %v1677 = vpop.f32.mrb[0].mxu0
    %1678 = vmatprep.mubr.bf16.mxu0 0
    %1679 = vmatmul.mubr.bf16.gmra.mrb[0].mxu0 %v1544
    %v1680 = vpop.f32.mrb[0].mxu0
    %v1681 = vadd.f32 0.0, %v1680
    %v1682 = vpop.f32.mrb[0].mxu0
    %v1683 = vpop.f32.mrb[0].mxu0
    %v1684 = vadd.f32 0.0, %v1683
    %v1685 = vpop.f32.mrb[0].mxu0
    %1686 = vmatprep.mubr.bf16.mxu0 0
    %1687 = vmatmul.mubr.bf16.gmra.mrb[0].mxu0 %v1545
    %v1688 = vpop.f32.mrb[0].mxu0
    %v1689 = vadd.f32 0.0, %v1688
    %v1690 = vpop.f32.mrb[0].mxu0
    %v1691 = vpop.f32.mrb[0].mxu0
    %v1692 = vadd.f32 0.0, %v1691
    %v1693 = vpop.f32.mrb[0].mxu0
    %1694 = vmatprep.mubr.bf16.mxu0 0
    %1695 = vmatmul.mubr.bf16.gmra.mrb[0].mxu0 %v1546
    %v1696 = vpop.f32.mrb[0].mxu0
    %v1697 = vadd.f32 0.0, %v1696
    %v1698 = vpop.f32.mrb[0].mxu0
    %v1699 = vpop.f32.mrb[0].mxu0
    %v1700 = vadd.f32 0.0, %v1699
    %v1701 = vpop.f32.mrb[0].mxu0
    %1702 = vmatprep.mubr.bf16.mxu0 0
    %1703 = vmatmul.mubr.bf16.gmra.mrb[0].mxu0 %v1547
    %v1704 = vpop.f32.mrb[0].mxu0
    %v1705 = vadd.f32 0.0, %v1704
    %v1706 = vpop.f32.mrb[0].mxu0
    %v1707 = vpop.f32.mrb[0].mxu0
    %v1708 = vadd.f32 0.0, %v1707
    %v1709 = vpop.f32.mrb[0].mxu0
    %1710 = vmatprep.mubr.bf16.mxu0 0
    %1711 = vmatmul.mubr.bf16.gmra.mrb[0].mxu0 %v1548
    %v1712 = vpop.f32.mrb[0].mxu0
    %v1713 = vadd.f32 0.0, %v1712
    %v1714 = vpop.f32.mrb[0].mxu0
    %v1715 = vpop.f32.mrb[0].mxu0
    %v1716 = vadd.f32 0.0, %v1715
    %v1717 = vpop.f32.mrb[0].mxu0
    %1718 = vmatprep.mubr.bf16.mxu0 0
    %1719 = vmatmul.mubr.bf16.gmra.mrb[0].mxu0 %v1549
    %v1720 = vpop.f32.mrb[0].mxu0
    %v1721 = vadd.f32 0.0, %v1720
    %v1722 = vpop.f32.mrb[0].mxu0
    %v1723 = vpop.f32.mrb[0].mxu0
    %v1724 = vadd.f32 0.0, %v1723
    %v1725 = vpop.f32.mrb[0].mxu0
    %1726 = vmatprep.mubr.bf16.mxu0 0
    %1727 = vmatmul.mubr.bf16.gmra.mrb[0].mxu0 %v1550
    %v1728 = vpop.f32.mrb[0].mxu0
    %v1729 = vadd.f32 0.0, %v1728
    %v1730 = vpop.f32.mrb[0].mxu0
    %v1731 = vpop.f32.mrb[0].mxu0
    %v1732 = vadd.f32 0.0, %v1731
    %v1733 = vpop.f32.mrb[0].mxu0
    %1734 = vmatprep.mubr.bf16.mxu0 0
    %1735 = vmatmul.mubr.bf16.gmra.mrb[0].mxu0 %v1551
    %v1736 = vpop.f32.mrb[0].mxu0
    %v1737 = vadd.f32 0.0, %v1736
    %v1738 = vpop.f32.mrb[0].mxu0
    %v1739 = vpop.f32.mrb[0].mxu0
    %v1740 = vadd.f32 0.0, %v1739
    %v1741 = vpop.f32.mrb[0].mxu0
    %1742 = vmatprep.mubr.bf16.mxu0 0
    %1743 = vmatmul.mubr.bf16.gmra.mrb[0].mxu0 %v1552
    %v1744 = vpop.f32.mrb[0].mxu0
    %v1745 = vadd.f32 0.0, %v1744
    %v1746 = vpop.f32.mrb[0].mxu0
    %v1747 = vpop.f32.mrb[0].mxu0
    %v1748 = vadd.f32 0.0, %v1747
    %v1749 = vpop.f32.mrb[0].mxu0
    %1750 = vmatprep.mubr.bf16.mxu0 0
    %1751 = vmatmul.mubr.bf16.gmra.mrb[0].mxu0 %v1553
    %v1752 = vpop.f32.mrb[0].mxu0
    %v1753 = vadd.f32 0.0, %v1752
    %v1754 = vpop.f32.mrb[0].mxu0
    %v1755 = vpop.f32.mrb[0].mxu0
    %v1756 = vadd.f32 0.0, %v1755
    %v1757 = vpop.f32.mrb[0].mxu0
    %1758 = vmatprep.mubr.bf16.mxu0 0
    %1759 = vmatmul.mubr.bf16.gmra.mrb[0].mxu0 %v1554
    %v1760 = vpop.f32.mrb[0].mxu0
    %v1761 = vadd.f32 0.0, %v1760
    %v1762 = vpop.f32.mrb[0].mxu0
    %v1763 = vpop.f32.mrb[0].mxu0
    %v1764 = vadd.f32 0.0, %v1763
    %v1765 = vpop.f32.mrb[0].mxu0
    %1766 = vmatprep.mubr.bf16.mxu0 0
    %1767 = vmatmul.mubr.bf16.gmra.mrb[0].mxu0 %v1555
    %v1768 = vpop.f32.mrb[0].mxu0
    %v1769 = vadd.f32 0.0, %v1768
    %v1770 = vpop.f32.mrb[0].mxu0
    %v1771 = vpop.f32.mrb[0].mxu0
    %v1772 = vadd.f32 0.0, %v1771
    %v1773 = vpop.f32.mrb[0].mxu0
    %1774 = vmatprep.mubr.bf16.mxu0 0
    %1775 = vmatmul.mubr.bf16.gmra.mrb[0].mxu0 %v1556
    %v1776 = vpop.f32.mrb[0].mxu0
    %v1777 = vadd.f32 0.0, %v1776
    %v1778 = vpop.f32.mrb[0].mxu0
    %v1779 = vpop.f32.mrb[0].mxu0
    %v1780 = vadd.f32 0.0, %v1779
    %v1781 = vpop.f32.mrb[0].mxu0
    %1782 = vmatprep.mubr.bf16.mxu0 0
    %1783 = vmatmul.mubr.bf16.gmra.mrb[0].mxu0 %v1557
    %v1784 = vpop.f32.mrb[0].mxu0
    %v1785 = vadd.f32 0.0, %v1784
    %v1786 = vpop.f32.mrb[0].mxu0
    %v1787 = vpop.f32.mrb[0].mxu0
    %v1788 = vadd.f32 0.0, %v1787
    %v1789 = vpop.f32.mrb[0].mxu0
    %1790 = vmatprep.mubr.bf16.mxu0 0
    %1791 = vmatmul.mubr.bf16.gmra.mrb[0].mxu0 %v1558
    %v1792 = vpop.f32.mrb[0].mxu0
    %v1793 = vadd.f32 0.0, %v1792
    %v1794 = vpop.f32.mrb[0].mxu0
    %v1795 = vpop.f32.mrb[0].mxu0
    %v1796 = vadd.f32 0.0, %v1795
    %v1797 = vpop.f32.mrb[0].mxu0
    %1798 = vmatprep.mubr.bf16.mxu0 0
    %1799 = vmatmul.mubr.bf16.gmra.mrb[0].mxu0 %v1559
    %v1800 = vpop.f32.mrb[0].mxu0
    %v1801 = vadd.f32 0.0, %v1800
    %v1802 = vpop.f32.mrb[0].mxu0
    %v1803 = vpop.f32.mrb[0].mxu0
    %v1804 = vadd.f32 0.0, %v1803
    %v1805 = vpop.f32.mrb[0].mxu0
    %1806 = vmatprep.mubr.bf16.mxu0 0
    %1807 = vmatmul.mubr.bf16.gmra.mrb[0].mxu0 %v1560
    %v1808 = vpop.f32.mrb[0].mxu0
    %v1809 = vadd.f32 0.0, %v1808
    %v1810 = vpop.f32.mrb[0].mxu0
    %v1811 = vpop.f32.mrb[0].mxu0
    %v1812 = vadd.f32 0.0, %v1811
    %v1813 = vpop.f32.mrb[0].mxu0
    %1814 = vmatprep.mubr.bf16.mxu0 0
    %1815 = vmatmul.mubr.bf16.gmra.mrb[0].mxu0 %v1561
    %v1816 = vpop.f32.mrb[0].mxu0
    %v1817 = vadd.f32 0.0, %v1816
    %v1818 = vpop.f32.mrb[0].mxu0
    %v1819 = vpop.f32.mrb[0].mxu0
    %v1820 = vadd.f32 0.0, %v1819
    %v1821 = vpop.f32.mrb[0].mxu0
    %1822 = vmatprep.mubr.bf16.mxu0 0
    %1823 = vmatmul.mubr.bf16.gmra.mrb[0].mxu0 %v1562
    %v1824 = vpop.f32.mrb[0].mxu0
    %v1825 = vadd.f32 0.0, %v1824
    %v1826 = vpop.f32.mrb[0].mxu0
    %v1827 = vpop.f32.mrb[0].mxu0
    %v1828 = vadd.f32 0.0, %v1827
    %v1829 = vpop.f32.mrb[0].mxu0
    %1830 = vmatprep.mubr.bf16.mxu0 0
    %1831 = vmatmul.mubr.bf16.gmra.mrb[0].mxu0 %v1563
    %v1832 = vpop.f32.mrb[0].mxu0
    %v1833 = vadd.f32 0.0, %v1832
    %v1834 = vpop.f32.mrb[0].mxu0
    %v1835 = vpop.f32.mrb[0].mxu0
    %v1836 = vadd.f32 0.0, %v1835
    %v1837 = vpop.f32.mrb[0].mxu0
    %1838 = vmatprep.mubr.bf16.mxu0 0
    %1839 = vmatmul.mubr.bf16.gmra.mrb[0].mxu0 %v1564
    %v1840 = vpop.f32.mrb[0].mxu0
    %v1841 = vadd.f32 0.0, %v1840
    %v1842 = vpop.f32.mrb[0].mxu0
    %v1843 = vpop.f32.mrb[0].mxu0
    %v1844 = vadd.f32 0.0, %v1843
    %v1845 = vpop.f32.mrb[0].mxu0
    %1846 = vmatprep.mubr.bf16.mxu0 0
    %1847 = vmatmul.mubr.bf16.gmra.mrb[0].mxu0 %v1565
    %v1848 = vpop.f32.mrb[0].mxu0
    %v1849 = vadd.f32 0.0, %v1848
    %v1850 = vpop.f32.mrb[0].mxu0
    %v1851 = vpop.f32.mrb[0].mxu0
    %v1852 = vadd.f32 0.0, %v1851
    %v1853 = vpop.f32.mrb[0].mxu0
    %1854 = vdwg.mxu0
    %v1855 = vpack.c.bf16 %v1668, %v1665
    %v1856 = vpack.c.bf16 %v1676, %v1673
    %v1857 = vpack.c.bf16 %v1684, %v1681
    %v1858 = vpack.c.bf16 %v1692, %v1689
    %v1859 = vpack.c.bf16 %v1700, %v1697
    %v1860 = vpack.c.bf16 %v1708, %v1705
    %v1861 = vpack.c.bf16 %v1716, %v1713
    %v1862 = vpack.c.bf16 %v1724, %v1721
    %v1863 = vpack.c.bf16 %v1732, %v1729
    %v1864 = vpack.c.bf16 %v1740, %v1737
    %v1865 = vpack.c.bf16 %v1748, %v1745
    %v1866 = vpack.c.bf16 %v1756, %v1753
    %v1867 = vpack.c.bf16 %v1764, %v1761
    %v1868 = vpack.c.bf16 %v1772, %v1769
    %v1869 = vpack.c.bf16 %v1780, %v1777
    %v1870 = vpack.c.bf16 %v1788, %v1785
    %v1871 = vpack.c.bf16 %v1796, %v1793
    %v1872 = vpack.c.bf16 %v1804, %v1801
    %v1873 = vpack.c.bf16 %v1812, %v1809
    %v1874 = vpack.c.bf16 %v1820, %v1817
    %v1875 = vpack.c.bf16 %v1828, %v1825
    %v1876 = vpack.c.bf16 %v1836, %v1833
    %v1877 = vpack.c.bf16 %v1844, %v1841
    %v1878 = vpack.c.bf16 %v1852, %v1849
    %v1879 = vld [vmem:[%s5] sm:$0x1]
    %v1881 = vlaneseq
    %v1882 = vshrl.u32 %v1881, 7
    %v1883 = vsub.s32 0, %v1882
    %v1884 = vrot.slane %v1879, %v1883
    %1886 = vmatprep.subr.bf16.mxu0 0
    %1887 = vmatpush1.bf16.msra.mxu0 %v1855
    %1888 = vmatprep.subr.bf16.mxu0 0
    %1889 = vmatpush1.bf16.msra.mxu0 %v1856
    %1890 = vmatprep.subr.bf16.mxu0 0
    %1891 = vmatpush1.bf16.msra.mxu0 %v1857
    %1892 = vmatprep.subr.bf16.mxu0 0
    %1893 = vmatpush1.bf16.msra.mxu0 %v1858
    %1894 = vmatprep.subr.bf16.mxu0 0
    %1895 = vmatpush1.bf16.msra.mxu0 %v1859
    %1896 = vmatprep.subr.bf16.mxu0 0
    %1897 = vmatpush1.bf16.msra.mxu0 %v1860
    %1898 = vmatprep.subr.bf16.mxu0 0
    %1899 = vmatpush1.bf16.msra.mxu0 %v1861
    %1900 = vmatprep.subr.bf16.mxu0 0
    %1901 = vmatpush1.bf16.msra.mxu0 %v1862
    %1902 = vmatprep.subr.bf16.mxu0 0
    %1903 = vmatpush1.bf16.msra.mxu0 %v1863
    %1904 = vmatprep.subr.bf16.mxu0 0
    %1905 = vmatpush1.bf16.msra.mxu0 %v1864
    %1906 = vmatprep.subr.bf16.mxu0 0
    %1907 = vmatpush1.bf16.msra.mxu0 %v1865
    %1908 = vmatprep.subr.bf16.mxu0 0
    %1909 = vmatpush1.bf16.msra.mxu0 %v1866
    %1910 = vmatprep.subr.bf16.mxu0 0
    %1911 = vmatpush1.bf16.msra.mxu0 %v1867
    %1912 = vmatprep.subr.bf16.mxu0 0
    %1913 = vmatpush1.bf16.msra.mxu0 %v1868
    %1914 = vmatprep.subr.bf16.mxu0 0
    %1915 = vmatpush1.bf16.msra.mxu0 %v1869
    %1916 = vmatprep.subr.bf16.mxu0 0
    %1917 = vmatpush1.bf16.msra.mxu0 %v1870
    %1918 = vmatprep.mubr.bf16.mxu0 %v901
    %1919 = vmatmul.mubr.bf16.gmra.mrb[0].mxu0 %v900
    %v1920 = vpop.f32.mrb[0].mxu0
    %v1921 = vadd.f32 %v1884, %v1920
    %v1922 = vpop.f32.mrb[0].mxu0
    %v1923 = vpop.f32.mrb[0].mxu0
    %v1924 = vadd.f32 %v1884, %v1923
    %v1925 = vpop.f32.mrb[0].mxu0
    %1926 = vmatprep.mubr.bf16.mxu0 %v904
    %1927 = vmatmul.mubr.bf16.gmra.mrb[0].mxu0 %v903
    %v1928 = vpop.f32.mrb[0].mxu0
    %v1929 = vadd.f32 %v1884, %v1928
    %v1930 = vpop.f32.mrb[0].mxu0
    %v1931 = vpop.f32.mrb[0].mxu0
    %v1932 = vadd.f32 %v1884, %v1931
    %v1933 = vpop.f32.mrb[0].mxu0
    %1934 = vmatprep.mubr.bf16.mxu0 %v907
    %1935 = vmatmul.mubr.bf16.gmra.mrb[0].mxu0 %v906
    %v1936 = vpop.f32.mrb[0].mxu0
    %v1937 = vadd.f32 %v1884, %v1936
    %v1938 = vpop.f32.mrb[0].mxu0
    %v1939 = vpop.f32.mrb[0].mxu0
    %v1940 = vadd.f32 %v1884, %v1939
    %v1941 = vpop.f32.mrb[0].mxu0
    %1942 = vmatprep.mubr.bf16.mxu0 %v910
    %1943 = vmatmul.mubr.bf16.gmra.mrb[0].mxu0 %v909
    %v1944 = vpop.f32.mrb[0].mxu0
    %v1945 = vadd.f32 %v1884, %v1944
    %v1946 = vpop.f32.mrb[0].mxu0
    %v1947 = vpop.f32.mrb[0].mxu0
    %v1948 = vadd.f32 %v1884, %v1947
    %v1949 = vpop.f32.mrb[0].mxu0
    %1950 = vmatprep.mubr.bf16.mxu0 %v913
    %1951 = vmatmul.mubr.bf16.gmra.mrb[0].mxu0 %v912
    %v1952 = vpop.f32.mrb[0].mxu0
    %v1953 = vadd.f32 %v1884, %v1952
    %v1954 = vpop.f32.mrb[0].mxu0
    %v1955 = vpop.f32.mrb[0].mxu0
    %v1956 = vadd.f32 %v1884, %v1955
    %v1957 = vpop.f32.mrb[0].mxu0
    %1958 = vmatprep.mubr.bf16.mxu0 %v916
    %1959 = vmatmul.mubr.bf16.gmra.mrb[0].mxu0 %v915
    %v1960 = vpop.f32.mrb[0].mxu0
    %v1961 = vadd.f32 %v1884, %v1960
    %v1962 = vpop.f32.mrb[0].mxu0
    %v1963 = vpop.f32.mrb[0].mxu0
    %v1964 = vadd.f32 %v1884, %v1963
    %v1965 = vpop.f32.mrb[0].mxu0
    %1966 = vmatprep.mubr.bf16.mxu0 %v919
    %1967 = vmatmul.mubr.bf16.gmra.mrb[0].mxu0 %v918
    %v1968 = vpop.f32.mrb[0].mxu0
    %v1969 = vadd.f32 %v1884, %v1968
    %v1970 = vpop.f32.mrb[0].mxu0
    %v1971 = vpop.f32.mrb[0].mxu0
    %v1972 = vadd.f32 %v1884, %v1971
    %v1973 = vpop.f32.mrb[0].mxu0
    %1974 = vmatprep.mubr.bf16.mxu0 %v922
    %1975 = vmatmul.mubr.bf16.gmra.mrb[0].mxu0 %v921
    %v1976 = vpop.f32.mrb[0].mxu0
    %v1977 = vadd.f32 %v1884, %v1976
    %v1978 = vpop.f32.mrb[0].mxu0
    %v1979 = vpop.f32.mrb[0].mxu0
    %v1980 = vadd.f32 %v1884, %v1979
    %v1981 = vpop.f32.mrb[0].mxu0
    %1982 = vmatprep.mubr.bf16.mxu0 %v925
    %1983 = vmatmul.mubr.bf16.gmra.mrb[0].mxu0 %v924
    %v1984 = vpop.f32.mrb[0].mxu0
    %v1985 = vadd.f32 %v1884, %v1984
    %v1986 = vpop.f32.mrb[0].mxu0
    %v1987 = vpop.f32.mrb[0].mxu0
    %v1988 = vadd.f32 %v1884, %v1987
    %v1989 = vpop.f32.mrb[0].mxu0
    %1990 = vmatprep.mubr.bf16.mxu0 %v928
    %1991 = vmatmul.mubr.bf16.gmra.mrb[0].mxu0 %v927
    %v1992 = vpop.f32.mrb[0].mxu0
    %v1993 = vadd.f32 %v1884, %v1992
    %v1994 = vpop.f32.mrb[0].mxu0
    %v1995 = vpop.f32.mrb[0].mxu0
    %v1996 = vadd.f32 %v1884, %v1995
    %v1997 = vpop.f32.mrb[0].mxu0
    %1998 = vmatprep.mubr.bf16.mxu0 %v931
    %1999 = vmatmul.mubr.bf16.gmra.mrb[0].mxu0 %v930
    %v2000 = vpop.f32.mrb[0].mxu0
    %v2001 = vadd.f32 %v1884, %v2000
    %v2002 = vpop.f32.mrb[0].mxu0
    %v2003 = vpop.f32.mrb[0].mxu0
    %v2004 = vadd.f32 %v1884, %v2003
    %v2005 = vpop.f32.mrb[0].mxu0
    %2006 = vmatprep.mubr.bf16.mxu0 %v934
    %2007 = vmatmul.mubr.bf16.gmra.mrb[0].mxu0 %v933
    %v2008 = vpop.f32.mrb[0].mxu0
    %v2009 = vadd.f32 %v1884, %v2008
    %v2010 = vpop.f32.mrb[0].mxu0
    %v2011 = vpop.f32.mrb[0].mxu0
    %v2012 = vadd.f32 %v1884, %v2011
    %v2013 = vpop.f32.mrb[0].mxu0
    %2014 = vmatprep.mubr.bf16.mxu0 %v937
    %2015 = vmatmul.mubr.bf16.gmra.mrb[0].mxu0 %v936
    %v2016 = vpop.f32.mrb[0].mxu0
    %v2017 = vadd.f32 %v1884, %v2016
    %v2018 = vpop.f32.mrb[0].mxu0
    %v2019 = vpop.f32.mrb[0].mxu0
    %v2020 = vadd.f32 %v1884, %v2019
    %v2021 = vpop.f32.mrb[0].mxu0
    %2022 = vmatprep.mubr.bf16.mxu0 %v940
    %2023 = vmatmul.mubr.bf16.gmra.mrb[0].mxu0 %v939
    %v2024 = vpop.f32.mrb[0].mxu0
    %v2025 = vadd.f32 %v1884, %v2024
    %v2026 = vpop.f32.mrb[0].mxu0
    %v2027 = vpop.f32.mrb[0].mxu0
    %v2028 = vadd.f32 %v1884, %v2027
    %v2029 = vpop.f32.mrb[0].mxu0
    %2030 = vmatprep.mubr.bf16.mxu0 %v943
    %2031 = vmatmul.mubr.bf16.gmra.mrb[0].mxu0 %v942
    %v2032 = vpop.f32.mrb[0].mxu0
    %v2033 = vadd.f32 %v1884, %v2032
    %v2034 = vpop.f32.mrb[0].mxu0
    %v2035 = vpop.f32.mrb[0].mxu0
    %v2036 = vadd.f32 %v1884, %v2035
    %v2037 = vpop.f32.mrb[0].mxu0
    %2038 = vmatprep.mubr.bf16.mxu0 %v946
    %2039 = vmatmul.mubr.bf16.gmra.mrb[0].mxu0 %v945
    %v2040 = vpop.f32.mrb[0].mxu0
    %v2041 = vadd.f32 %v1884, %v2040
    %v2042 = vpop.f32.mrb[0].mxu0
    %v2043 = vpop.f32.mrb[0].mxu0
    %v2044 = vadd.f32 %v1884, %v2043
    %v2045 = vpop.f32.mrb[0].mxu0
    %2046 = vmatprep.mubr.bf16.mxu0 %v949
    %2047 = vmatmul.mubr.bf16.gmra.mrb[0].mxu0 %v948
    %v2048 = vpop.f32.mrb[0].mxu0
    %v2049 = vadd.f32 %v1884, %v2048
    %v2050 = vpop.f32.mrb[0].mxu0
    %v2051 = vpop.f32.mrb[0].mxu0
    %v2052 = vadd.f32 %v1884, %v2051
    %v2053 = vpop.f32.mrb[0].mxu0
    %2054 = vmatprep.mubr.bf16.mxu0 %v952
    %2055 = vmatmul.mubr.bf16.gmra.mrb[0].mxu0 %v951
    %v2056 = vpop.f32.mrb[0].mxu0
    %v2057 = vadd.f32 %v1884, %v2056
    %v2058 = vpop.f32.mrb[0].mxu0
    %v2059 = vpop.f32.mrb[0].mxu0
    %v2060 = vadd.f32 %v1884, %v2059
    %v2061 = vpop.f32.mrb[0].mxu0
    %2062 = vmatprep.mubr.bf16.mxu0 %v955
    %2063 = vmatmul.mubr.bf16.gmra.mrb[0].mxu0 %v954
    %v2064 = vpop.f32.mrb[0].mxu0
    %v2065 = vadd.f32 %v1884, %v2064
    %v2066 = vpop.f32.mrb[0].mxu0
    %v2067 = vpop.f32.mrb[0].mxu0
    %v2068 = vadd.f32 %v1884, %v2067
    %v2069 = vpop.f32.mrb[0].mxu0
    %2070 = vmatprep.mubr.bf16.mxu0 %v958
    %2071 = vmatmul.mubr.bf16.gmra.mrb[0].mxu0 %v957
    %v2072 = vpop.f32.mrb[0].mxu0
    %v2073 = vadd.f32 %v1884, %v2072
    %v2074 = vpop.f32.mrb[0].mxu0
    %v2075 = vpop.f32.mrb[0].mxu0
    %v2076 = vadd.f32 %v1884, %v2075
    %v2077 = vpop.f32.mrb[0].mxu0
    %2078 = vmatprep.mubr.bf16.mxu0 %v961
    %2079 = vmatmul.mubr.bf16.gmra.mrb[0].mxu0 %v960
    %v2080 = vpop.f32.mrb[0].mxu0
    %v2081 = vadd.f32 %v1884, %v2080
    %v2082 = vpop.f32.mrb[0].mxu0
    %v2083 = vpop.f32.mrb[0].mxu0
    %v2084 = vadd.f32 %v1884, %v2083
    %v2085 = vpop.f32.mrb[0].mxu0
    %2086 = vmatprep.mubr.bf16.mxu0 %v964
    %2087 = vmatmul.mubr.bf16.gmra.mrb[0].mxu0 %v963
    %v2088 = vpop.f32.mrb[0].mxu0
    %v2089 = vadd.f32 %v1884, %v2088
    %v2090 = vpop.f32.mrb[0].mxu0
    %v2091 = vpop.f32.mrb[0].mxu0
    %v2092 = vadd.f32 %v1884, %v2091
    %v2093 = vpop.f32.mrb[0].mxu0
    %2094 = vmatprep.mubr.bf16.mxu0 %v967
    %2095 = vmatmul.mubr.bf16.gmra.mrb[0].mxu0 %v966
    %v2096 = vpop.f32.mrb[0].mxu0
    %v2097 = vadd.f32 %v1884, %v2096
    %v2098 = vpop.f32.mrb[0].mxu0
    %v2099 = vpop.f32.mrb[0].mxu0
    %v2100 = vadd.f32 %v1884, %v2099
    %v2101 = vpop.f32.mrb[0].mxu0
    %2102 = vmatprep.mubr.bf16.mxu0 %v970
    %2103 = vmatmul.mubr.bf16.gmra.mrb[0].mxu0 %v969
    %v2104 = vpop.f32.mrb[0].mxu0
    %v2105 = vadd.f32 %v1884, %v2104
    %v2106 = vpop.f32.mrb[0].mxu0
    %v2107 = vpop.f32.mrb[0].mxu0
    %v2108 = vadd.f32 %v1884, %v2107
    %v2109 = vpop.f32.mrb[0].mxu0
    %2110 = vdwg.mxu0
    %2111 = vmatprep.subr.bf16.mxu0 0
    %2112 = vmatpush1.bf16.msra.mxu0 %v1871
    %2113 = vmatprep.subr.bf16.mxu0 0
    %2114 = vmatpush1.bf16.msra.mxu0 %v1872
    %2115 = vmatprep.subr.bf16.mxu0 0
    %2116 = vmatpush1.bf16.msra.mxu0 %v1873
    %2117 = vmatprep.subr.bf16.mxu0 0
    %2118 = vmatpush1.bf16.msra.mxu0 %v1874
    %2119 = vmatprep.subr.bf16.mxu0 0
    %2120 = vmatpush1.bf16.msra.mxu0 %v1875
    %2121 = vmatprep.subr.bf16.mxu0 0
    %2122 = vmatpush1.bf16.msra.mxu0 %v1876
    %2123 = vmatprep.subr.bf16.mxu0 0
    %2124 = vmatpush1.bf16.msra.mxu0 %v1877
    %2125 = vmatprep.subr.bf16.mxu0 0
    %2126 = vmatpush1.bf16.msra.mxu0 %v1878
    %2127 = vmatprep.subr.bf16.mxu0 0
    %2128 = vmatpush1.bf16.msra.mxu0 0
    %2129 = vmatprep.subr.bf16.mxu0 0
    %2130 = vmatpush1.bf16.msra.mxu0 0
    %2131 = vmatprep.subr.bf16.mxu0 0
    %2132 = vmatpush1.bf16.msra.mxu0 0
    %2133 = vmatprep.subr.bf16.mxu0 0
    %2134 = vmatpush1.bf16.msra.mxu0 0
    %2135 = vmatprep.subr.bf16.mxu0 0
    %2136 = vmatpush1.bf16.msra.mxu0 0
    %2137 = vmatprep.subr.bf16.mxu0 0
    %2138 = vmatpush1.bf16.msra.mxu0 0
    %2139 = vmatprep.subr.bf16.mxu0 0
    %2140 = vmatpush1.bf16.msra.mxu0 0
    %2141 = vmatprep.subr.bf16.mxu0 0
    %2142 = vmatpush1.bf16.msra.mxu0 0
    %2143 = vmatprep.mubr.bf16.mxu0 0
    %2144 = vmatmul.mubr.bf16.gmra.mrb[0].mxu0 %v902
    %v2145 = vpop.f32.mrb[0].mxu0
    %v2146 = vadd.f32 %v1921, %v2145
    %v2147 = vpop.f32.mrb[0].mxu0
    %v2148 = vpop.f32.mrb[0].mxu0
    %v2149 = vadd.f32 %v1924, %v2148
    %v2150 = vpop.f32.mrb[0].mxu0
    %2151 = vmatprep.mubr.bf16.mxu0 0
    %2152 = vmatmul.mubr.bf16.gmra.mrb[0].mxu0 %v905
    %v2153 = vpop.f32.mrb[0].mxu0
    %v2154 = vadd.f32 %v1929, %v2153
    %v2155 = vpop.f32.mrb[0].mxu0
    %v2156 = vpop.f32.mrb[0].mxu0
    %v2157 = vadd.f32 %v1932, %v2156
    %v2158 = vpop.f32.mrb[0].mxu0
    %2159 = vmatprep.mubr.bf16.mxu0 0
    %2160 = vmatmul.mubr.bf16.gmra.mrb[0].mxu0 %v908
    %v2161 = vpop.f32.mrb[0].mxu0
    %v2162 = vadd.f32 %v1937, %v2161
    %v2163 = vpop.f32.mrb[0].mxu0
    %v2164 = vpop.f32.mrb[0].mxu0
    %v2165 = vadd.f32 %v1940, %v2164
    %v2166 = vpop.f32.mrb[0].mxu0
    %2167 = vmatprep.mubr.bf16.mxu0 0
    %2168 = vmatmul.mubr.bf16.gmra.mrb[0].mxu0 %v911
    %v2169 = vpop.f32.mrb[0].mxu0
    %v2170 = vadd.f32 %v1945, %v2169
    %v2171 = vpop.f32.mrb[0].mxu0
    %v2172 = vpop.f32.mrb[0].mxu0
    %v2173 = vadd.f32 %v1948, %v2172
    %v2174 = vpop.f32.mrb[0].mxu0
    %2175 = vmatprep.mubr.bf16.mxu0 0
    %2176 = vmatmul.mubr.bf16.gmra.mrb[0].mxu0 %v914
    %v2177 = vpop.f32.mrb[0].mxu0
    %v2178 = vadd.f32 %v1953, %v2177
    %v2179 = vpop.f32.mrb[0].mxu0
    %v2180 = vpop.f32.mrb[0].mxu0
    %v2181 = vadd.f32 %v1956, %v2180
    %v2182 = vpop.f32.mrb[0].mxu0
    %2183 = vmatprep.mubr.bf16.mxu0 0
    %2184 = vmatmul.mubr.bf16.gmra.mrb[0].mxu0 %v917
    %v2185 = vpop.f32.mrb[0].mxu0
    %v2186 = vadd.f32 %v1961, %v2185
    %v2187 = vpop.f32.mrb[0].mxu0
    %v2188 = vpop.f32.mrb[0].mxu0
    %v2189 = vadd.f32 %v1964, %v2188
    %v2190 = vpop.f32.mrb[0].mxu0
    %2191 = vmatprep.mubr.bf16.mxu0 0
    %2192 = vmatmul.mubr.bf16.gmra.mrb[0].mxu0 %v920
    %v2193 = vpop.f32.mrb[0].mxu0
    %v2194 = vadd.f32 %v1969, %v2193
    %v2195 = vpop.f32.mrb[0].mxu0
    %v2196 = vpop.f32.mrb[0].mxu0
    %v2197 = vadd.f32 %v1972, %v2196
    %v2198 = vpop.f32.mrb[0].mxu0
    %2199 = vmatprep.mubr.bf16.mxu0 0
    %2200 = vmatmul.mubr.bf16.gmra.mrb[0].mxu0 %v923
    %v2201 = vpop.f32.mrb[0].mxu0
    %v2202 = vadd.f32 %v1977, %v2201
    %v2203 = vpop.f32.mrb[0].mxu0
    %v2204 = vpop.f32.mrb[0].mxu0
    %v2205 = vadd.f32 %v1980, %v2204
    %v2206 = vpop.f32.mrb[0].mxu0
    %2207 = vmatprep.mubr.bf16.mxu0 0
    %2208 = vmatmul.mubr.bf16.gmra.mrb[0].mxu0 %v926
    %v2209 = vpop.f32.mrb[0].mxu0
    %v2210 = vadd.f32 %v1985, %v2209
    %v2211 = vpop.f32.mrb[0].mxu0
    %v2212 = vpop.f32.mrb[0].mxu0
    %v2213 = vadd.f32 %v1988, %v2212
    %v2214 = vpop.f32.mrb[0].mxu0
    %2215 = vmatprep.mubr.bf16.mxu0 0
    %2216 = vmatmul.mubr.bf16.gmra.mrb[0].mxu0 %v929
    %v2217 = vpop.f32.mrb[0].mxu0
    %v2218 = vadd.f32 %v1993, %v2217
    %v2219 = vpop.f32.mrb[0].mxu0
    %v2220 = vpop.f32.mrb[0].mxu0
    %v2221 = vadd.f32 %v1996, %v2220
    %v2222 = vpop.f32.mrb[0].mxu0
    %2223 = vmatprep.mubr.bf16.mxu0 0
    %2224 = vmatmul.mubr.bf16.gmra.mrb[0].mxu0 %v932
    %v2225 = vpop.f32.mrb[0].mxu0
    %v2226 = vadd.f32 %v2001, %v2225
    %v2227 = vpop.f32.mrb[0].mxu0
    %v2228 = vpop.f32.mrb[0].mxu0
    %v2229 = vadd.f32 %v2004, %v2228
    %v2230 = vpop.f32.mrb[0].mxu0
    %2231 = vmatprep.mubr.bf16.mxu0 0
    %2232 = vmatmul.mubr.bf16.gmra.mrb[0].mxu0 %v935
    %v2233 = vpop.f32.mrb[0].mxu0
    %v2234 = vadd.f32 %v2009, %v2233
    %v2235 = vpop.f32.mrb[0].mxu0
    %v2236 = vpop.f32.mrb[0].mxu0
    %v2237 = vadd.f32 %v2012, %v2236
    %v2238 = vpop.f32.mrb[0].mxu0
    %2239 = vmatprep.mubr.bf16.mxu0 0
    %2240 = vmatmul.mubr.bf16.gmra.mrb[0].mxu0 %v938
    %v2241 = vpop.f32.mrb[0].mxu0
    %v2242 = vadd.f32 %v2017, %v2241
    %v2243 = vpop.f32.mrb[0].mxu0
    %v2244 = vpop.f32.mrb[0].mxu0
    %v2245 = vadd.f32 %v2020, %v2244
    %v2246 = vpop.f32.mrb[0].mxu0
    %2247 = vmatprep.mubr.bf16.mxu0 0
    %2248 = vmatmul.mubr.bf16.gmra.mrb[0].mxu0 %v941
    %v2249 = vpop.f32.mrb[0].mxu0
    %v2250 = vadd.f32 %v2025, %v2249
    %v2251 = vpop.f32.mrb[0].mxu0
    %v2252 = vpop.f32.mrb[0].mxu0
    %v2253 = vadd.f32 %v2028, %v2252
    %v2254 = vpop.f32.mrb[0].mxu0
    %2255 = vmatprep.mubr.bf16.mxu0 0
    %2256 = vmatmul.mubr.bf16.gmra.mrb[0].mxu0 %v944
    %v2257 = vpop.f32.mrb[0].mxu0
    %v2258 = vadd.f32 %v2033, %v2257
    %v2259 = vpop.f32.mrb[0].mxu0
    %v2260 = vpop.f32.mrb[0].mxu0
    %v2261 = vadd.f32 %v2036, %v2260
    %v2262 = vpop.f32.mrb[0].mxu0
    %2263 = vmatprep.mubr.bf16.mxu0 0
    %2264 = vmatmul.mubr.bf16.gmra.mrb[0].mxu0 %v947
    %v2265 = vpop.f32.mrb[0].mxu0
    %v2266 = vadd.f32 %v2041, %v2265
    %v2267 = vpop.f32.mrb[0].mxu0
    %v2268 = vpop.f32.mrb[0].mxu0
    %v2269 = vadd.f32 %v2044, %v2268
    %v2270 = vpop.f32.mrb[0].mxu0
    %2271 = vmatprep.mubr.bf16.mxu0 0
    %2272 = vmatmul.mubr.bf16.gmra.mrb[0].mxu0 %v950
    %v2273 = vpop.f32.mrb[0].mxu0
    %v2274 = vadd.f32 %v2049, %v2273
    %v2275 = vpop.f32.mrb[0].mxu0
    %v2276 = vpop.f32.mrb[0].mxu0
    %v2277 = vadd.f32 %v2052, %v2276
    %v2278 = vpop.f32.mrb[0].mxu0
    %2279 = vmatprep.mubr.bf16.mxu0 0
    %2280 = vmatmul.mubr.bf16.gmra.mrb[0].mxu0 %v953
    %v2281 = vpop.f32.mrb[0].mxu0
    %v2282 = vadd.f32 %v2057, %v2281
    %v2283 = vpop.f32.mrb[0].mxu0
    %v2284 = vpop.f32.mrb[0].mxu0
    %v2285 = vadd.f32 %v2060, %v2284
    %v2286 = vpop.f32.mrb[0].mxu0
    %2287 = vmatprep.mubr.bf16.mxu0 0
    %2288 = vmatmul.mubr.bf16.gmra.mrb[0].mxu0 %v956
    %v2289 = vpop.f32.mrb[0].mxu0
    %v2290 = vadd.f32 %v2065, %v2289
    %v2291 = vpop.f32.mrb[0].mxu0
    %v2292 = vpop.f32.mrb[0].mxu0
    %v2293 = vadd.f32 %v2068, %v2292
    %v2294 = vpop.f32.mrb[0].mxu0
    %2295 = vmatprep.mubr.bf16.mxu0 0
    %2296 = vmatmul.mubr.bf16.gmra.mrb[0].mxu0 %v959
    %v2297 = vpop.f32.mrb[0].mxu0
    %v2298 = vadd.f32 %v2073, %v2297
    %v2299 = vpop.f32.mrb[0].mxu0
    %v2300 = vpop.f32.mrb[0].mxu0
    %v2301 = vadd.f32 %v2076, %v2300
    %v2302 = vpop.f32.mrb[0].mxu0
    %2303 = vmatprep.mubr.bf16.mxu0 0
    %2304 = vmatmul.mubr.bf16.gmra.mrb[0].mxu0 %v962
    %v2305 = vpop.f32.mrb[0].mxu0
    %v2306 = vadd.f32 %v2081, %v2305
    %v2307 = vpop.f32.mrb[0].mxu0
    %v2308 = vpop.f32.mrb[0].mxu0
    %v2309 = vadd.f32 %v2084, %v2308
    %v2310 = vpop.f32.mrb[0].mxu0
    %2311 = vmatprep.mubr.bf16.mxu0 0
    %2312 = vmatmul.mubr.bf16.gmra.mrb[0].mxu0 %v965
    %v2313 = vpop.f32.mrb[0].mxu0
    %v2314 = vadd.f32 %v2089, %v2313
    %v2315 = vpop.f32.mrb[0].mxu0
    %v2316 = vpop.f32.mrb[0].mxu0
    %v2317 = vadd.f32 %v2092, %v2316
    %v2318 = vpop.f32.mrb[0].mxu0
    %2319 = vmatprep.mubr.bf16.mxu0 0
    %2320 = vmatmul.mubr.bf16.gmra.mrb[0].mxu0 %v968
    %v2321 = vpop.f32.mrb[0].mxu0
    %v2322 = vadd.f32 %v2097, %v2321
    %v2323 = vpop.f32.mrb[0].mxu0
    %v2324 = vpop.f32.mrb[0].mxu0
    %v2325 = vadd.f32 %v2100, %v2324
    %v2326 = vpop.f32.mrb[0].mxu0
    %2327 = vmatprep.mubr.bf16.mxu0 0
    %2328 = vmatmul.mubr.bf16.gmra.mrb[0].mxu0 %v971
    %v2329 = vpop.f32.mrb[0].mxu0
    %v2330 = vadd.f32 %v2105, %v2329
    %v2331 = vpop.f32.mrb[0].mxu0
    %v2332 = vpop.f32.mrb[0].mxu0
    %v2333 = vadd.f32 %v2108, %v2332
    %v2334 = vpop.f32.mrb[0].mxu0
    %2335 = vdwg.mxu0
    %v2336 = vpack.c.bf16 %v2149, %v2146
    %v2337 = vpack.c.bf16 %v2157, %v2154
    %v2338 = vpack.c.bf16 %v2165, %v2162
    %v2339 = vpack.c.bf16 %v2173, %v2170
    %v2340 = vpack.c.bf16 %v2181, %v2178
    %v2341 = vpack.c.bf16 %v2189, %v2186
    %v2342 = vpack.c.bf16 %v2197, %v2194
    %v2343 = vpack.c.bf16 %v2205, %v2202
    %v2344 = vpack.c.bf16 %v2213, %v2210
    %v2345 = vpack.c.bf16 %v2221, %v2218
    %v2346 = vpack.c.bf16 %v2229, %v2226
    %v2347 = vpack.c.bf16 %v2237, %v2234
    %v2348 = vpack.c.bf16 %v2245, %v2242
    %v2349 = vpack.c.bf16 %v2253, %v2250
    %v2350 = vpack.c.bf16 %v2261, %v2258
    %v2351 = vpack.c.bf16 %v2269, %v2266
    %v2352 = vpack.c.bf16 %v2277, %v2274
    %v2353 = vpack.c.bf16 %v2285, %v2282
    %v2354 = vpack.c.bf16 %v2293, %v2290
    %v2355 = vpack.c.bf16 %v2301, %v2298
    %v2356 = vpack.c.bf16 %v2309, %v2306
    %v2357 = vpack.c.bf16 %v2317, %v2314
    %v2358 = vpack.c.bf16 %v2325, %v2322
    %v2359 = vpack.c.bf16 %v2333, %v2330
    %v2360 = vld [vmem:[%s6] sm:$0xff]
    %v2361 = vld [vmem:[%s6 + $0x8] sm:$0xf]
    %v2362 = vld [vmem:[%s6 + $0xc] sm:$0xff]
    %v2363 = vld [vmem:[%s6 + $0x14] sm:$0xf]
    %v2364 = vld [vmem:[%s6 + $0x18] sm:$0xff]
    %v2365 = vld [vmem:[%s6 + $0x20] sm:$0xf]
    %v2366 = vld [vmem:[%s6 + $0x24] sm:$0xff]
    %v2367 = vld [vmem:[%s6 + $0x2c] sm:$0xf]
    %v2368 = vld [vmem:[%s6 + $0x30] sm:$0xff]
    %v2369 = vld [vmem:[%s6 + $0x38] sm:$0xf]
    %v2370 = vld [vmem:[%s6 + $0x3c] sm:$0xff]
    %v2371 = vld [vmem:[%s6 + $0x44] sm:$0xf]
    %v2372 = vld [vmem:[%s6 + $0x48] sm:$0xff]
    %v2373 = vld [vmem:[%s6 + $0x50] sm:$0xf]
    %v2374 = vld [vmem:[%s6 + $0x54] sm:$0xff]
    %v2375 = vld [vmem:[%s6 + $0x5c] sm:$0xf]
    %v2376 = vld [vmem:[%s6 + $0x60] sm:$0xff]
    %v2377 = vld [vmem:[%s6 + $0x68] sm:$0xf]
    %v2378 = vld [vmem:[%s6 + $0x6c] sm:$0xff]
    %v2379 = vld [vmem:[%s6 + $0x74] sm:$0xf]
    %v2380 = vld [vmem:[%s6 + $0x78] sm:$0xff]
    %v2381 = vld [vmem:[%s6 + $0x80] sm:$0xf]
    %v2382 = vld [vmem:[%s6 + $0x84] sm:$0xff]
    %v2383 = vld [vmem:[%s6 + $0x8c] sm:$0xf]
    %v2384 = vld [vmem:[%s6 + $0x90] sm:$0xff]
    %v2385 = vld [vmem:[%s6 + $0x98] sm:$0xf]
    %v2386 = vld [vmem:[%s6 + $0x9c] sm:$0xff]
    %v2387 = vld [vmem:[%s6 + $0xa4] sm:$0xf]
    %v2388 = vld [vmem:[%s6 + $0xa8] sm:$0xff]
    %v2389 = vld [vmem:[%s6 + $0xb0] sm:$0xf]
    %v2390 = vld [vmem:[%s6 + $0xb4] sm:$0xff]
    %v2391 = vld [vmem:[%s6 + $0xbc] sm:$0xf]
    %v2424 = vunpack.c.l.b16 %v2360
    %v2425 = vunpack.c.h.b16 %v2360
    %v2426 = vunpack.c.l.b16 %v2361
    %v2427 = vunpack.c.l.b16 %v2362
    %v2428 = vunpack.c.h.b16 %v2362
    %v2429 = vunpack.c.l.b16 %v2363
    %v2430 = vunpack.c.l.b16 %v2364
    %v2431 = vunpack.c.h.b16 %v2364
    %v2432 = vunpack.c.l.b16 %v2365
    %v2433 = vunpack.c.l.b16 %v2366
    %v2434 = vunpack.c.h.b16 %v2366
    %v2435 = vunpack.c.l.b16 %v2367
    %v2436 = vunpack.c.l.b16 %v2368
    %v2437 = vunpack.c.h.b16 %v2368
    %v2438 = vunpack.c.l.b16 %v2369
    %v2439 = vunpack.c.l.b16 %v2370
    %v2440 = vunpack.c.h.b16 %v2370
    %v2441 = vunpack.c.l.b16 %v2371
    %v2442 = vunpack.c.l.b16 %v2372
    %v2443 = vunpack.c.h.b16 %v2372
    %v2444 = vunpack.c.l.b16 %v2373
    %v2445 = vunpack.c.l.b16 %v2374
    %v2446 = vunpack.c.h.b16 %v2374
    %v2447 = vunpack.c.l.b16 %v2375
    %v2448 = vunpack.c.l.b16 %v2376
    %v2449 = vunpack.c.h.b16 %v2376
    %v2450 = vunpack.c.l.b16 %v2377
    %v2451 = vunpack.c.l.b16 %v2378
    %v2452 = vunpack.c.h.b16 %v2378
    %v2453 = vunpack.c.l.b16 %v2379
    %v2454 = vunpack.c.l.b16 %v2380
    %v2455 = vunpack.c.h.b16 %v2380
    %v2456 = vunpack.c.l.b16 %v2381
    %v2457 = vunpack.c.l.b16 %v2382
    %v2458 = vunpack.c.h.b16 %v2382
    %v2459 = vunpack.c.l.b16 %v2383
    %v2460 = vunpack.c.l.b16 %v2384
    %v2461 = vunpack.c.h.b16 %v2384
    %v2462 = vunpack.c.l.b16 %v2385
    %v2463 = vunpack.c.l.b16 %v2386
    %v2464 = vunpack.c.h.b16 %v2386
    %v2465 = vunpack.c.l.b16 %v2387
    %v2466 = vunpack.c.l.b16 %v2388
    %v2467 = vunpack.c.h.b16 %v2388
    %v2468 = vunpack.c.l.b16 %v2389
    %v2469 = vunpack.c.l.b16 %v2390
    %v2470 = vunpack.c.h.b16 %v2390
    %v2471 = vunpack.c.l.b16 %v2391
    %v2472 = vpack.c.b16 %v2427, %v2424
    %v2473 = vpack.c.b16 %v2428, %v2425
    %v2474 = vpack.c.b16 %v2429, %v2426
    %v2475 = vpack.c.b16 %v2433, %v2430
    %v2476 = vpack.c.b16 %v2434, %v2431
    %v2477 = vpack.c.b16 %v2435, %v2432
    %v2478 = vpack.c.b16 %v2439, %v2436
    %v2479 = vpack.c.b16 %v2440, %v2437
    %v2480 = vpack.c.b16 %v2441, %v2438
    %v2481 = vpack.c.b16 %v2445, %v2442
    %v2482 = vpack.c.b16 %v2446, %v2443
    %v2483 = vpack.c.b16 %v2447, %v2444
    %v2484 = vpack.c.b16 %v2451, %v2448
    %v2485 = vpack.c.b16 %v2452, %v2449
    %v2486 = vpack.c.b16 %v2453, %v2450
    %v2487 = vpack.c.b16 %v2457, %v2454
    %v2488 = vpack.c.b16 %v2458, %v2455
    %v2489 = vpack.c.b16 %v2459, %v2456
    %v2490 = vpack.c.b16 %v2463, %v2460
    %v2491 = vpack.c.b16 %v2464, %v2461
    %v2492 = vpack.c.b16 %v2465, %v2462
    %v2493 = vpack.c.b16 %v2469, %v2466
    %v2494 = vpack.c.b16 %v2470, %v2467
    %v2495 = vpack.c.b16 %v2471, %v2468
    %2520 = vmatprep.subr.bf16.mxu0 0
    %2521 = vmatpush1.bf16.msra.mxu0 %v2336
    %2522 = vmatprep.subr.bf16.mxu0 0
    %2523 = vmatpush1.bf16.msra.mxu0 %v2337
    %2524 = vmatprep.subr.bf16.mxu0 0
    %2525 = vmatpush1.bf16.msra.mxu0 %v2338
    %2526 = vmatprep.subr.bf16.mxu0 0
    %2527 = vmatpush1.bf16.msra.mxu0 %v2339
    %2528 = vmatprep.subr.bf16.mxu0 0
    %2529 = vmatpush1.bf16.msra.mxu0 %v2340
    %2530 = vmatprep.subr.bf16.mxu0 0
    %2531 = vmatpush1.bf16.msra.mxu0 %v2341
    %2532 = vmatprep.subr.bf16.mxu0 0
    %2533 = vmatpush1.bf16.msra.mxu0 %v2342
    %2534 = vmatprep.subr.bf16.mxu0 0
    %2535 = vmatpush1.bf16.msra.mxu0 %v2343
    %2536 = vmatprep.subr.bf16.mxu0 0
    %2537 = vmatpush1.bf16.msra.mxu0 %v2344
    %2538 = vmatprep.subr.bf16.mxu0 0
    %2539 = vmatpush1.bf16.msra.mxu0 %v2345
    %2540 = vmatprep.subr.bf16.mxu0 0
    %2541 = vmatpush1.bf16.msra.mxu0 %v2346
    %2542 = vmatprep.subr.bf16.mxu0 0
    %2543 = vmatpush1.bf16.msra.mxu0 %v2347
    %2544 = vmatprep.subr.bf16.mxu0 0
    %2545 = vmatpush1.bf16.msra.mxu0 %v2348
    %2546 = vmatprep.subr.bf16.mxu0 0
    %2547 = vmatpush1.bf16.msra.mxu0 %v2349
    %2548 = vmatprep.subr.bf16.mxu0 0
    %2549 = vmatpush1.bf16.msra.mxu0 %v2350
    %2550 = vmatprep.subr.bf16.mxu0 0
    %2551 = vmatpush1.bf16.msra.mxu0 %v2351
    %2552 = vmatprep.mubr.bf16.mxu0 %v2473
    %2553 = vmatmul.mubr.bf16.gmra.mrb[0].mxu0 %v2472
    %v2554 = vpop.f32.mrb[0].mxu0
    %v2555 = vadd.f32 0.0, %v2554
    %v2556 = vpop.f32.mrb[0].mxu0
    %v2557 = vpop.f32.mrb[0].mxu0
    %v2558 = vadd.f32 0.0, %v2557
    %v2559 = vpop.f32.mrb[0].mxu0
    %2560 = vmatprep.mubr.bf16.mxu0 %v2476
    %2561 = vmatmul.mubr.bf16.gmra.mrb[0].mxu0 %v2475
    %v2562 = vpop.f32.mrb[0].mxu0
    %v2563 = vadd.f32 0.0, %v2562
    %v2564 = vpop.f32.mrb[0].mxu0
    %v2565 = vpop.f32.mrb[0].mxu0
    %v2566 = vadd.f32 0.0, %v2565
    %v2567 = vpop.f32.mrb[0].mxu0
    %2568 = vmatprep.mubr.bf16.mxu0 %v2479
    %2569 = vmatmul.mubr.bf16.gmra.mrb[0].mxu0 %v2478
    %v2570 = vpop.f32.mrb[0].mxu0
    %v2571 = vadd.f32 0.0, %v2570
    %v2572 = vpop.f32.mrb[0].mxu0
    %v2573 = vpop.f32.mrb[0].mxu0
    %v2574 = vadd.f32 0.0, %v2573
    %v2575 = vpop.f32.mrb[0].mxu0
    %2576 = vmatprep.mubr.bf16.mxu0 %v2482
    %2577 = vmatmul.mubr.bf16.gmra.mrb[0].mxu0 %v2481
    %v2578 = vpop.f32.mrb[0].mxu0
    %v2579 = vadd.f32 0.0, %v2578
    %v2580 = vpop.f32.mrb[0].mxu0
    %v2581 = vpop.f32.mrb[0].mxu0
    %v2582 = vadd.f32 0.0, %v2581
    %v2583 = vpop.f32.mrb[0].mxu0
    %2584 = vmatprep.mubr.bf16.mxu0 %v2485
    %2585 = vmatmul.mubr.bf16.gmra.mrb[0].mxu0 %v2484
    %v2586 = vpop.f32.mrb[0].mxu0
    %v2587 = vadd.f32 0.0, %v2586
    %v2588 = vpop.f32.mrb[0].mxu0
    %v2589 = vpop.f32.mrb[0].mxu0
    %v2590 = vadd.f32 0.0, %v2589
    %v2591 = vpop.f32.mrb[0].mxu0
    %2592 = vmatprep.mubr.bf16.mxu0 %v2488
    %2593 = vmatmul.mubr.bf16.gmra.mrb[0].mxu0 %v2487
    %v2594 = vpop.f32.mrb[0].mxu0
    %v2595 = vadd.f32 0.0, %v2594
    %v2596 = vpop.f32.mrb[0].mxu0
    %v2597 = vpop.f32.mrb[0].mxu0
    %v2598 = vadd.f32 0.0, %v2597
    %v2599 = vpop.f32.mrb[0].mxu0
    %2600 = vmatprep.mubr.bf16.mxu0 %v2491
    %2601 = vmatmul.mubr.bf16.gmra.mrb[0].mxu0 %v2490
    %v2602 = vpop.f32.mrb[0].mxu0
    %v2603 = vadd.f32 0.0, %v2602
    %v2604 = vpop.f32.mrb[0].mxu0
    %v2605 = vpop.f32.mrb[0].mxu0
    %v2606 = vadd.f32 0.0, %v2605
    %v2607 = vpop.f32.mrb[0].mxu0
    %2608 = vmatprep.mubr.bf16.mxu0 %v2494
    %2609 = vmatmul.mubr.bf16.gmra.mrb[0].mxu0 %v2493
    %v2610 = vpop.f32.mrb[0].mxu0
    %v2611 = vadd.f32 0.0, %v2610
    %v2612 = vpop.f32.mrb[0].mxu0
    %v2613 = vpop.f32.mrb[0].mxu0
    %v2614 = vadd.f32 0.0, %v2613
    %v2615 = vpop.f32.mrb[0].mxu0
    %2616 = vdwg.mxu0
    %2617 = vmatprep.subr.bf16.mxu0 0
    %2618 = vmatpush1.bf16.msra.mxu0 %v2352
    %2619 = vmatprep.subr.bf16.mxu0 0
    %2620 = vmatpush1.bf16.msra.mxu0 %v2353
    %2621 = vmatprep.subr.bf16.mxu0 0
    %2622 = vmatpush1.bf16.msra.mxu0 %v2354
    %2623 = vmatprep.subr.bf16.mxu0 0
    %2624 = vmatpush1.bf16.msra.mxu0 %v2355
    %2625 = vmatprep.subr.bf16.mxu0 0
    %2626 = vmatpush1.bf16.msra.mxu0 %v2356
    %2627 = vmatprep.subr.bf16.mxu0 0
    %2628 = vmatpush1.bf16.msra.mxu0 %v2357
    %2629 = vmatprep.subr.bf16.mxu0 0
    %2630 = vmatpush1.bf16.msra.mxu0 %v2358
    %2631 = vmatprep.subr.bf16.mxu0 0
    %2632 = vmatpush1.bf16.msra.mxu0 %v2359
    %2633 = vmatprep.subr.bf16.mxu0 0
    %2634 = vmatpush1.bf16.msra.mxu0 0
    %2635 = vmatprep.subr.bf16.mxu0 0
    %2636 = vmatpush1.bf16.msra.mxu0 0
    %2637 = vmatprep.subr.bf16.mxu0 0
    %2638 = vmatpush1.bf16.msra.mxu0 0
    %2639 = vmatprep.subr.bf16.mxu0 0
    %2640 = vmatpush1.bf16.msra.mxu0 0
    %2641 = vmatprep.subr.bf16.mxu0 0
    %2642 = vmatpush1.bf16.msra.mxu0 0
    %2643 = vmatprep.subr.bf16.mxu0 0
    %2644 = vmatpush1.bf16.msra.mxu0 0
    %2645 = vmatprep.subr.bf16.mxu0 0
    %2646 = vmatpush1.bf16.msra.mxu0 0
    %2647 = vmatprep.subr.bf16.mxu0 0
    %2648 = vmatpush1.bf16.msra.mxu0 0
    %2649 = vmatprep.mubr.bf16.mxu0 0
    %2650 = vmatmul.mubr.bf16.gmra.mrb[0].mxu0 %v2474
    %v2651 = vpop.f32.mrb[0].mxu0
    %v2652 = vadd.f32 %v2555, %v2651
    %v2653 = vpop.f32.mrb[0].mxu0
    %v2654 = vpop.f32.mrb[0].mxu0
    %v2655 = vadd.f32 %v2558, %v2654
    %v2656 = vpop.f32.mrb[0].mxu0
    %2657 = vmatprep.mubr.bf16.mxu0 0
    %2658 = vmatmul.mubr.bf16.gmra.mrb[0].mxu0 %v2477
    %v2659 = vpop.f32.mrb[0].mxu0
    %v2660 = vadd.f32 %v2563, %v2659
    %v2661 = vpop.f32.mrb[0].mxu0
    %v2662 = vpop.f32.mrb[0].mxu0
    %v2663 = vadd.f32 %v2566, %v2662
    %v2664 = vpop.f32.mrb[0].mxu0
    %2665 = vmatprep.mubr.bf16.mxu0 0
    %2666 = vmatmul.mubr.bf16.gmra.mrb[0].mxu0 %v2480
    %v2667 = vpop.f32.mrb[0].mxu0
    %v2668 = vadd.f32 %v2571, %v2667
    %v2669 = vpop.f32.mrb[0].mxu0
    %v2670 = vpop.f32.mrb[0].mxu0
    %v2671 = vadd.f32 %v2574, %v2670
    %v2672 = vpop.f32.mrb[0].mxu0
    %2673 = vmatprep.mubr.bf16.mxu0 0
    %2674 = vmatmul.mubr.bf16.gmra.mrb[0].mxu0 %v2483
    %v2675 = vpop.f32.mrb[0].mxu0
    %v2676 = vadd.f32 %v2579, %v2675
    %v2677 = vpop.f32.mrb[0].mxu0
    %v2678 = vpop.f32.mrb[0].mxu0
    %v2679 = vadd.f32 %v2582, %v2678
    %v2680 = vpop.f32.mrb[0].mxu0
    %2681 = vmatprep.mubr.bf16.mxu0 0
    %2682 = vmatmul.mubr.bf16.gmra.mrb[0].mxu0 %v2486
    %v2683 = vpop.f32.mrb[0].mxu0
    %v2684 = vadd.f32 %v2587, %v2683
    %v2685 = vpop.f32.mrb[0].mxu0
    %v2686 = vpop.f32.mrb[0].mxu0
    %v2687 = vadd.f32 %v2590, %v2686
    %v2688 = vpop.f32.mrb[0].mxu0
    %2689 = vmatprep.mubr.bf16.mxu0 0
    %2690 = vmatmul.mubr.bf16.gmra.mrb[0].mxu0 %v2489
    %v2691 = vpop.f32.mrb[0].mxu0
    %v2692 = vadd.f32 %v2595, %v2691
    %v2693 = vpop.f32.mrb[0].mxu0
    %v2694 = vpop.f32.mrb[0].mxu0
    %v2695 = vadd.f32 %v2598, %v2694
    %v2696 = vpop.f32.mrb[0].mxu0
    %2697 = vmatprep.mubr.bf16.mxu0 0
    %2698 = vmatmul.mubr.bf16.gmra.mrb[0].mxu0 %v2492
    %v2699 = vpop.f32.mrb[0].mxu0
    %v2700 = vadd.f32 %v2603, %v2699
    %v2701 = vpop.f32.mrb[0].mxu0
    %v2702 = vpop.f32.mrb[0].mxu0
    %v2703 = vadd.f32 %v2606, %v2702
    %v2704 = vpop.f32.mrb[0].mxu0
    %2705 = vmatprep.mubr.bf16.mxu0 0
    %2706 = vmatmul.mubr.bf16.gmra.mrb[0].mxu0 %v2495
    %v2707 = vpop.f32.mrb[0].mxu0
    %v2708 = vadd.f32 %v2611, %v2707
    %v2709 = vpop.f32.mrb[0].mxu0
    %v2710 = vpop.f32.mrb[0].mxu0
    %v2711 = vadd.f32 %v2614, %v2710
    %v2712 = vpop.f32.mrb[0].mxu0
    %2713 = vdwg.mxu0
    %v2714 = vld [vmem:[#allocation5] sm:$0xff]
    %v2715 = vld [vmem:[#allocation5 + $0x8] sm:$0xf]
    %v2716 = vld [vmem:[#allocation5 + $0xc] sm:$0xff]
    %v2717 = vld [vmem:[#allocation5 + $0x14] sm:$0xf]
    %v2718 = vld [vmem:[#allocation5 + $0x18] sm:$0xff]
    %v2719 = vld [vmem:[#allocation5 + $0x20] sm:$0xf]
    %v2720 = vld [vmem:[#allocation5 + $0x24] sm:$0xff]
    %v2721 = vld [vmem:[#allocation5 + $0x2c] sm:$0xf]
    %v2722 = vld [vmem:[#allocation5 + $0x30] sm:$0xff]
    %v2723 = vld [vmem:[#allocation5 + $0x38] sm:$0xf]
    %v2724 = vld [vmem:[#allocation5 + $0x3c] sm:$0xff]
    %v2725 = vld [vmem:[#allocation5 + $0x44] sm:$0xf]
    %v2726 = vld [vmem:[#allocation5 + $0x48] sm:$0xff]
    %v2727 = vld [vmem:[#allocation5 + $0x50] sm:$0xf]
    %v2728 = vld [vmem:[#allocation5 + $0x54] sm:$0xff]
    %v2729 = vld [vmem:[#allocation5 + $0x5c] sm:$0xf]
    %v2730 = vld [vmem:[#allocation5 + $0x60] sm:$0xff]
    %v2731 = vld [vmem:[#allocation5 + $0x68] sm:$0xf]
    %v2732 = vld [vmem:[#allocation5 + $0x6c] sm:$0xff]
    %v2733 = vld [vmem:[#allocation5 + $0x74] sm:$0xf]
    %v2734 = vld [vmem:[#allocation5 + $0x78] sm:$0xff]
    %v2735 = vld [vmem:[#allocation5 + $0x80] sm:$0xf]
    %v2736 = vld [vmem:[#allocation5 + $0x84] sm:$0xff]
    %v2737 = vld [vmem:[#allocation5 + $0x8c] sm:$0xf]
    %v2738 = vld [vmem:[#allocation5 + $0x90] sm:$0xff]
    %v2739 = vld [vmem:[#allocation5 + $0x98] sm:$0xf]
    %v2740 = vld [vmem:[#allocation5 + $0x9c] sm:$0xff]
    %v2741 = vld [vmem:[#allocation5 + $0xa4] sm:$0xf]
    %v2742 = vld [vmem:[#allocation5 + $0xa8] sm:$0xff]
    %v2743 = vld [vmem:[#allocation5 + $0xb0] sm:$0xf]
    %v2744 = vld [vmem:[#allocation5 + $0xb4] sm:$0xff]
    %v2745 = vld [vmem:[#allocation5 + $0xbc] sm:$0xf]
    %v2778 = vunpack.c.l.b16 %v2714
    %v2779 = vunpack.c.h.b16 %v2714
    %v2780 = vunpack.c.l.b16 %v2715
    %v2781 = vunpack.c.l.b16 %v2716
    %v2782 = vunpack.c.h.b16 %v2716
    %v2783 = vunpack.c.l.b16 %v2717
    %v2784 = vunpack.c.l.b16 %v2718
    %v2785 = vunpack.c.h.b16 %v2718
    %v2786 = vunpack.c.l.b16 %v2719
    %v2787 = vunpack.c.l.b16 %v2720
    %v2788 = vunpack.c.h.b16 %v2720
    %v2789 = vunpack.c.l.b16 %v2721
    %v2790 = vunpack.c.l.b16 %v2722
    %v2791 = vunpack.c.h.b16 %v2722
    %v2792 = vunpack.c.l.b16 %v2723
    %v2793 = vunpack.c.l.b16 %v2724
    %v2794 = vunpack.c.h.b16 %v2724
    %v2795 = vunpack.c.l.b16 %v2725
    %v2796 = vunpack.c.l.b16 %v2726
    %v2797 = vunpack.c.h.b16 %v2726
    %v2798 = vunpack.c.l.b16 %v2727
    %v2799 = vunpack.c.l.b16 %v2728
    %v2800 = vunpack.c.h.b16 %v2728
    %v2801 = vunpack.c.l.b16 %v2729
    %v2802 = vunpack.c.l.b16 %v2730
    %v2803 = vunpack.c.h.b16 %v2730
    %v2804 = vunpack.c.l.b16 %v2731
    %v2805 = vunpack.c.l.b16 %v2732
    %v2806 = vunpack.c.h.b16 %v2732
    %v2807 = vunpack.c.l.b16 %v2733
    %v2808 = vunpack.c.l.b16 %v2734
    %v2809 = vunpack.c.h.b16 %v2734
    %v2810 = vunpack.c.l.b16 %v2735
    %v2811 = vunpack.c.l.b16 %v2736
    %v2812 = vunpack.c.h.b16 %v2736
    %v2813 = vunpack.c.l.b16 %v2737
    %v2814 = vunpack.c.l.b16 %v2738
    %v2815 = vunpack.c.h.b16 %v2738
    %v2816 = vunpack.c.l.b16 %v2739
    %v2817 = vunpack.c.l.b16 %v2740
    %v2818 = vunpack.c.h.b16 %v2740
    %v2819 = vunpack.c.l.b16 %v2741
    %v2820 = vunpack.c.l.b16 %v2742
    %v2821 = vunpack.c.h.b16 %v2742
    %v2822 = vunpack.c.l.b16 %v2743
    %v2823 = vunpack.c.l.b16 %v2744
    %v2824 = vunpack.c.h.b16 %v2744
    %v2825 = vunpack.c.l.b16 %v2745
    %v2826 = vpack.c.b16 %v2781, %v2778
    %v2827 = vpack.c.b16 %v2782, %v2779
    %v2828 = vpack.c.b16 %v2783, %v2780
    %v2829 = vpack.c.b16 %v2787, %v2784
    %v2830 = vpack.c.b16 %v2788, %v2785
    %v2831 = vpack.c.b16 %v2789, %v2786
    %v2832 = vpack.c.b16 %v2793, %v2790
    %v2833 = vpack.c.b16 %v2794, %v2791
    %v2834 = vpack.c.b16 %v2795, %v2792
    %v2835 = vpack.c.b16 %v2799, %v2796
    %v2836 = vpack.c.b16 %v2800, %v2797
    %v2837 = vpack.c.b16 %v2801, %v2798
    %v2838 = vpack.c.b16 %v2805, %v2802
    %v2839 = vpack.c.b16 %v2806, %v2803
    %v2840 = vpack.c.b16 %v2807, %v2804
    %v2841 = vpack.c.b16 %v2811, %v2808
    %v2842 = vpack.c.b16 %v2812, %v2809
    %v2843 = vpack.c.b16 %v2813, %v2810
    %v2844 = vpack.c.b16 %v2817, %v2814
    %v2845 = vpack.c.b16 %v2818, %v2815
    %v2846 = vpack.c.b16 %v2819, %v2816
    %v2847 = vpack.c.b16 %v2823, %v2820
    %v2848 = vpack.c.b16 %v2824, %v2821
    %v2849 = vpack.c.b16 %v2825, %v2822
    %2874 = vmatprep.subr.bf16.mxu0 0
    %2875 = vmatpush1.bf16.msra.mxu0 %v2336
    %2876 = vmatprep.subr.bf16.mxu0 0
    %2877 = vmatpush1.bf16.msra.mxu0 %v2337
    %2878 = vmatprep.subr.bf16.mxu0 0
    %2879 = vmatpush1.bf16.msra.mxu0 %v2338
    %2880 = vmatprep.subr.bf16.mxu0 0
    %2881 = vmatpush1.bf16.msra.mxu0 %v2339
    %2882 = vmatprep.subr.bf16.mxu0 0
    %2883 = vmatpush1.bf16.msra.mxu0 %v2340
    %2884 = vmatprep.subr.bf16.mxu0 0
    %2885 = vmatpush1.bf16.msra.mxu0 %v2341
    %2886 = vmatprep.subr.bf16.mxu0 0
    %2887 = vmatpush1.bf16.msra.mxu0 %v2342
    %2888 = vmatprep.subr.bf16.mxu0 0
    %2889 = vmatpush1.bf16.msra.mxu0 %v2343
    %2890 = vmatprep.subr.bf16.mxu0 0
    %2891 = vmatpush1.bf16.msra.mxu0 %v2344
    %2892 = vmatprep.subr.bf16.mxu0 0
    %2893 = vmatpush1.bf16.msra.mxu0 %v2345
    %2894 = vmatprep.subr.bf16.mxu0 0
    %2895 = vmatpush1.bf16.msra.mxu0 %v2346
    %2896 = vmatprep.subr.bf16.mxu0 0
    %2897 = vmatpush1.bf16.msra.mxu0 %v2347
    %2898 = vmatprep.subr.bf16.mxu0 0
    %2899 = vmatpush1.bf16.msra.mxu0 %v2348
    %2900 = vmatprep.subr.bf16.mxu0 0
    %2901 = vmatpush1.bf16.msra.mxu0 %v2349
    %2902 = vmatprep.subr.bf16.mxu0 0
    %2903 = vmatpush1.bf16.msra.mxu0 %v2350
    %2904 = vmatprep.subr.bf16.mxu0 0
    %2905 = vmatpush1.bf16.msra.mxu0 %v2351
    %2906 = vmatprep.mubr.bf16.mxu0 %v2827
    %2907 = vmatmul.mubr.bf16.gmra.mrb[0].mxu0 %v2826
    %v2908 = vpop.f32.mrb[0].mxu0
    %v2909 = vadd.f32 0.0, %v2908
    %v2910 = vpop.f32.mrb[0].mxu0
    %v2911 = vpop.f32.mrb[0].mxu0
    %v2912 = vadd.f32 0.0, %v2911
    %v2913 = vpop.f32.mrb[0].mxu0
    %2914 = vmatprep.mubr.bf16.mxu0 %v2830
    %2915 = vmatmul.mubr.bf16.gmra.mrb[0].mxu0 %v2829
    %v2916 = vpop.f32.mrb[0].mxu0
    %v2917 = vadd.f32 0.0, %v2916
    %v2918 = vpop.f32.mrb[0].mxu0
    %v2919 = vpop.f32.mrb[0].mxu0
    %v2920 = vadd.f32 0.0, %v2919
    %v2921 = vpop.f32.mrb[0].mxu0
    %2922 = vmatprep.mubr.bf16.mxu0 %v2833
    %2923 = vmatmul.mubr.bf16.gmra.mrb[0].mxu0 %v2832
    %v2924 = vpop.f32.mrb[0].mxu0
    %v2925 = vadd.f32 0.0, %v2924
    %v2926 = vpop.f32.mrb[0].mxu0
    %v2927 = vpop.f32.mrb[0].mxu0
    %v2928 = vadd.f32 0.0, %v2927
    %v2929 = vpop.f32.mrb[0].mxu0
    %2930 = vmatprep.mubr.bf16.mxu0 %v2836
    %2931 = vmatmul.mubr.bf16.gmra.mrb[0].mxu0 %v2835
    %v2932 = vpop.f32.mrb[0].mxu0
    %v2933 = vadd.f32 0.0, %v2932
    %v2934 = vpop.f32.mrb[0].mxu0
    %v2935 = vpop.f32.mrb[0].mxu0
    %v2936 = vadd.f32 0.0, %v2935
    %v2937 = vpop.f32.mrb[0].mxu0
    %2938 = vmatprep.mubr.bf16.mxu0 %v2839
    %2939 = vmatmul.mubr.bf16.gmra.mrb[0].mxu0 %v2838
    %v2940 = vpop.f32.mrb[0].mxu0
    %v2941 = vadd.f32 0.0, %v2940
    %v2942 = vpop.f32.mrb[0].mxu0
    %v2943 = vpop.f32.mrb[0].mxu0
    %v2944 = vadd.f32 0.0, %v2943
    %v2945 = vpop.f32.mrb[0].mxu0
    %2946 = vmatprep.mubr.bf16.mxu0 %v2842
    %2947 = vmatmul.mubr.bf16.gmra.mrb[0].mxu0 %v2841
    %v2948 = vpop.f32.mrb[0].mxu0
    %v2949 = vadd.f32 0.0, %v2948
    %v2950 = vpop.f32.mrb[0].mxu0
    %v2951 = vpop.f32.mrb[0].mxu0
    %v2952 = vadd.f32 0.0, %v2951
    %v2953 = vpop.f32.mrb[0].mxu0
    %2954 = vmatprep.mubr.bf16.mxu0 %v2845
    %2955 = vmatmul.mubr.bf16.gmra.mrb[0].mxu0 %v2844
    %v2956 = vpop.f32.mrb[0].mxu0
    %v2957 = vadd.f32 0.0, %v2956
    %v2958 = vpop.f32.mrb[0].mxu0
    %v2959 = vpop.f32.mrb[0].mxu0
    %v2960 = vadd.f32 0.0, %v2959
    %v2961 = vpop.f32.mrb[0].mxu0
    %2962 = vmatprep.mubr.bf16.mxu0 %v2848
    %2963 = vmatmul.mubr.bf16.gmra.mrb[0].mxu0 %v2847
    %v2964 = vpop.f32.mrb[0].mxu0
    %v2965 = vadd.f32 0.0, %v2964
    %v2966 = vpop.f32.mrb[0].mxu0
    %v2967 = vpop.f32.mrb[0].mxu0
    %v2968 = vadd.f32 0.0, %v2967
    %v2969 = vpop.f32.mrb[0].mxu0
    %2970 = vdwg.mxu0
    %2971 = vmatprep.subr.bf16.mxu0 0
    %2972 = vmatpush1.bf16.msra.mxu0 %v2352
    %2973 = vmatprep.subr.bf16.mxu0 0
    %2974 = vmatpush1.bf16.msra.mxu0 %v2353
    %2975 = vmatprep.subr.bf16.mxu0 0
    %2976 = vmatpush1.bf16.msra.mxu0 %v2354
    %2977 = vmatprep.subr.bf16.mxu0 0
    %2978 = vmatpush1.bf16.msra.mxu0 %v2355
    %2979 = vmatprep.subr.bf16.mxu0 0
    %2980 = vmatpush1.bf16.msra.mxu0 %v2356
    %2981 = vmatprep.subr.bf16.mxu0 0
    %2982 = vmatpush1.bf16.msra.mxu0 %v2357
    %2983 = vmatprep.subr.bf16.mxu0 0
    %2984 = vmatpush1.bf16.msra.mxu0 %v2358
    %2985 = vmatprep.subr.bf16.mxu0 0
    %2986 = vmatpush1.bf16.msra.mxu0 %v2359
    %2987 = vmatprep.subr.bf16.mxu0 0
    %2988 = vmatpush1.bf16.msra.mxu0 0
    %2989 = vmatprep.subr.bf16.mxu0 0
    %2990 = vmatpush1.bf16.msra.mxu0 0
    %2991 = vmatprep.subr.bf16.mxu0 0
    %2992 = vmatpush1.bf16.msra.mxu0 0
    %2993 = vmatprep.subr.bf16.mxu0 0
    %2994 = vmatpush1.bf16.msra.mxu0 0
    %2995 = vmatprep.subr.bf16.mxu0 0
    %2996 = vmatpush1.bf16.msra.mxu0 0
    %2997 = vmatprep.subr.bf16.mxu0 0
    %2998 = vmatpush1.bf16.msra.mxu0 0
    %2999 = vmatprep.subr.bf16.mxu0 0
    %3000 = vmatpush1.bf16.msra.mxu0 0
    %3001 = vmatprep.subr.bf16.mxu0 0
    %3002 = vmatpush1.bf16.msra.mxu0 0
    %3003 = vmatprep.mubr.bf16.mxu0 0
    %3004 = vmatmul.mubr.bf16.gmra.mrb[0].mxu0 %v2828
    %v3005 = vpop.f32.mrb[0].mxu0
    %v3006 = vadd.f32 %v2909, %v3005
    %v3007 = vpop.f32.mrb[0].mxu0
    %v3008 = vpop.f32.mrb[0].mxu0
    %v3009 = vadd.f32 %v2912, %v3008
    %v3010 = vpop.f32.mrb[0].mxu0
    %3011 = vmatprep.mubr.bf16.mxu0 0
    %3012 = vmatmul.mubr.bf16.gmra.mrb[0].mxu0 %v2831
    %v3013 = vpop.f32.mrb[0].mxu0
    %v3014 = vadd.f32 %v2917, %v3013
    %v3015 = vpop.f32.mrb[0].mxu0
    %v3016 = vpop.f32.mrb[0].mxu0
    %v3017 = vadd.f32 %v2920, %v3016
    %v3018 = vpop.f32.mrb[0].mxu0
    %3019 = vmatprep.mubr.bf16.mxu0 0
    %3020 = vmatmul.mubr.bf16.gmra.mrb[0].mxu0 %v2834
    %v3021 = vpop.f32.mrb[0].mxu0
    %v3022 = vadd.f32 %v2925, %v3021
    %v3023 = vpop.f32.mrb[0].mxu0
    %v3024 = vpop.f32.mrb[0].mxu0
    %v3025 = vadd.f32 %v2928, %v3024
    %v3026 = vpop.f32.mrb[0].mxu0
    %3027 = vmatprep.mubr.bf16.mxu0 0
    %3028 = vmatmul.mubr.bf16.gmra.mrb[0].mxu0 %v2837
    %v3029 = vpop.f32.mrb[0].mxu0
    %v3030 = vadd.f32 %v2933, %v3029
    %v3031 = vpop.f32.mrb[0].mxu0
    %v3032 = vpop.f32.mrb[0].mxu0
    %v3033 = vadd.f32 %v2936, %v3032
    %v3034 = vpop.f32.mrb[0].mxu0
    %3035 = vmatprep.mubr.bf16.mxu0 0
    %3036 = vmatmul.mubr.bf16.gmra.mrb[0].mxu0 %v2840
    %v3037 = vpop.f32.mrb[0].mxu0
    %v3038 = vadd.f32 %v2941, %v3037
    %v3039 = vpop.f32.mrb[0].mxu0
    %v3040 = vpop.f32.mrb[0].mxu0
    %v3041 = vadd.f32 %v2944, %v3040
    %v3042 = vpop.f32.mrb[0].mxu0
    %3043 = vmatprep.mubr.bf16.mxu0 0
    %3044 = vmatmul.mubr.bf16.gmra.mrb[0].mxu0 %v2843
    %v3045 = vpop.f32.mrb[0].mxu0
    %v3046 = vadd.f32 %v2949, %v3045
    %v3047 = vpop.f32.mrb[0].mxu0
    %v3048 = vpop.f32.mrb[0].mxu0
    %v3049 = vadd.f32 %v2952, %v3048
    %v3050 = vpop.f32.mrb[0].mxu0
    %3051 = vmatprep.mubr.bf16.mxu0 0
    %3052 = vmatmul.mubr.bf16.gmra.mrb[0].mxu0 %v2846
    %v3053 = vpop.f32.mrb[0].mxu0
    %v3054 = vadd.f32 %v2957, %v3053
    %v3055 = vpop.f32.mrb[0].mxu0
    %v3056 = vpop.f32.mrb[0].mxu0
    %v3057 = vadd.f32 %v2960, %v3056
    %v3058 = vpop.f32.mrb[0].mxu0
    %3059 = vmatprep.mubr.bf16.mxu0 0
    %3060 = vmatmul.mubr.bf16.gmra.mrb[0].mxu0 %v2849
    %v3061 = vpop.f32.mrb[0].mxu0
    %v3062 = vadd.f32 %v2965, %v3061
    %v3063 = vpop.f32.mrb[0].mxu0
    %v3064 = vpop.f32.mrb[0].mxu0
    %v3065 = vadd.f32 %v2968, %v3064
    %v3066 = vpop.f32.mrb[0].mxu0
    %3067 = vdwg.mxu0
    %v3068 = vmul.f32 %v2652, %v3006
    %v3069 = vmul.f32 %v2655, %v3009
    %v3070 = vmul.f32 %v2660, %v3014
    %v3071 = vmul.f32 %v2663, %v3017
    %v3072 = vmul.f32 %v2668, %v3022
    %v3073 = vmul.f32 %v2671, %v3025
    %v3074 = vmul.f32 %v2676, %v3030
    %v3075 = vmul.f32 %v2679, %v3033
    %v3076 = vmul.f32 %v2684, %v3038
    %v3077 = vmul.f32 %v2687, %v3041
    %v3078 = vmul.f32 %v2692, %v3046
    %v3079 = vmul.f32 %v2695, %v3049
    %v3080 = vmul.f32 %v2700, %v3054
    %v3081 = vmul.f32 %v2703, %v3057
    %v3082 = vmul.f32 %v2708, %v3062
    %v3083 = vmul.f32 %v2711, %v3065
    %vm3084 = vcmask 523264
    %v3085 = vsel %vm3084, %v3068, 0.0
    %3086 = vadd.xlane.f32.xlu0 %v3085
    %v3087 = vpop.xlane.xlu0 %3086
    %v3088 = vsel %vm3084, %v3069, 0.0
    %3089 = vadd.xlane.f32.xlu0 %v3088
    %v3090 = vpop.xlane.xlu0 %3089
    %v3091 = vsel %vm3084, %v3070, 0.0
    %3092 = vadd.xlane.f32.xlu0 %v3091
    %v3093 = vpop.xlane.xlu0 %3092
    %v3094 = vsel %vm3084, %v3071, 0.0
    %3095 = vadd.xlane.f32.xlu0 %v3094
    %v3096 = vpop.xlane.xlu0 %3095
    %v3097 = vsel %vm3084, %v3072, 0.0
    %3098 = vadd.xlane.f32.xlu0 %v3097
    %v3099 = vpop.xlane.xlu0 %3098
    %v3100 = vsel %vm3084, %v3073, 0.0
    %3101 = vadd.xlane.f32.xlu0 %v3100
    %v3102 = vpop.xlane.xlu0 %3101
    %v3103 = vsel %vm3084, %v3074, 0.0
    %3104 = vadd.xlane.f32.xlu0 %v3103
    %v3105 = vpop.xlane.xlu0 %3104
    %v3106 = vsel %vm3084, %v3075, 0.0
    %3107 = vadd.xlane.f32.xlu0 %v3106
    %v3108 = vpop.xlane.xlu0 %3107
    %v3109 = vsel %vm3084, %v3076, 0.0
    %3110 = vadd.xlane.f32.xlu0 %v3109
    %v3111 = vpop.xlane.xlu0 %3110
    %v3112 = vsel %vm3084, %v3077, 0.0
    %3113 = vadd.xlane.f32.xlu0 %v3112
    %v3114 = vpop.xlane.xlu0 %3113
    %v3115 = vsel %vm3084, %v3078, 0.0
    %3116 = vadd.xlane.f32.xlu0 %v3115
    %v3117 = vpop.xlane.xlu0 %3116
    %v3118 = vsel %vm3084, %v3079, 0.0
    %3119 = vadd.xlane.f32.xlu0 %v3118
    %v3120 = vpop.xlane.xlu0 %3119
    %v3121 = vsel %vm3084, %v3080, 0.0
    %3122 = vadd.xlane.f32.xlu0 %v3121
    %v3123 = vpop.xlane.xlu0 %3122
    %v3124 = vsel %vm3084, %v3081, 0.0
    %3125 = vadd.xlane.f32.xlu0 %v3124
    %v3126 = vpop.xlane.xlu0 %3125
    %v3127 = vsel %vm3084, %v3082, 0.0
    %3128 = vadd.xlane.f32.xlu0 %v3127
    %v3129 = vpop.xlane.xlu0 %3128
    %v3130 = vsel %vm3084, %v3083, 0.0
    %3131 = vadd.xlane.f32.xlu0 %v3130
    %v3132 = vpop.xlane.xlu0 %3131
    %v3149 = vlaneseq
    %v3150 = vand.u32 %v3149, 127
    %v3151 = vlaneseq
    %v3152 = vshrl.u32 %v3151, 7
    %v3153 = vsub.s32 %v3150, %v3152
    %v3154 = vrot.slane %v3087, %v3153
    %v3155 = vadd.s32 %v3150, 4294967288
    %v3156 = vlaneseq
    %v3157 = vshrl.u32 %v3156, 7
    %v3158 = vsub.s32 %v3155, %v3157
    %v3159 = vrot.slane %v3090, %v3158
    %vm3160 = vcmask 130112
    %v3161 = vsel %vm3160, %v3159, %v3154
    %v3162 = vadd.s32 %v3150, 4294967280
    %v3163 = vlaneseq
    %v3164 = vshrl.u32 %v3163, 7
    %v3165 = vsub.s32 %v3162, %v3164
    %v3166 = vrot.slane %v3093, %v3165
    %vm3167 = vcmask 195712
    %v3168 = vsel %vm3167, %v3166, %v3161
    %v3169 = vadd.s32 %v3150, 4294967272
    %v3170 = vlaneseq
    %v3171 = vshrl.u32 %v3170, 7
    %v3172 = vsub.s32 %v3169, %v3171
    %v3173 = vrot.slane %v3096, %v3172
    %vm3174 = vcmask 261312
    %v3175 = vsel %vm3174, %v3173, %v3168
    %v3176 = vadd.s32 %v3150, 4294967264
    %v3177 = vlaneseq
    %v3178 = vshrl.u32 %v3177, 7
    %v3179 = vsub.s32 %v3176, %v3178
    %v3180 = vrot.slane %v3099, %v3179
    %vm3181 = vcmask 326912
    %v3182 = vsel %vm3181, %v3180, %v3175
    %v3183 = vadd.s32 %v3150, 4294967256
    %v3184 = vlaneseq
    %v3185 = vshrl.u32 %v3184, 7
    %v3186 = vsub.s32 %v3183, %v3185
    %v3187 = vrot.slane %v3102, %v3186
    %vm3188 = vcmask 392512
    %v3189 = vsel %vm3188, %v3187, %v3182
    %v3190 = vadd.s32 %v3150, 4294967248
    %v3191 = vlaneseq
    %v3192 = vshrl.u32 %v3191, 7
    %v3193 = vsub.s32 %v3190, %v3192
    %v3194 = vrot.slane %v3105, %v3193
    %vm3195 = vcmask 458112
    %v3196 = vsel %vm3195, %v3194, %v3189
    %v3197 = vadd.s32 %v3150, 4294967240
    %v3198 = vlaneseq
    %v3199 = vshrl.u32 %v3198, 7
    %v3200 = vsub.s32 %v3197, %v3199
    %v3201 = vrot.slane %v3108, %v3200
    %vm3202 = vcmask 523712
    %v3203 = vsel %vm3202, %v3201, %v3196
    %v3204 = vadd.s32 %v3150, 4294967232
    %v3205 = vlaneseq
    %v3206 = vshrl.u32 %v3205, 7
    %v3207 = vsub.s32 %v3204, %v3206
    %v3208 = vrot.slane %v3111, %v3207
    %vm3209 = vcmask 589312
    %v3210 = vsel %vm3209, %v3208, %v3203
    %v3211 = vadd.s32 %v3150, 4294967224
    %v3212 = vlaneseq
    %v3213 = vshrl.u32 %v3212, 7
    %v3214 = vsub.s32 %v3211, %v3213
    %v3215 = vrot.slane %v3114, %v3214
    %vm3216 = vcmask 654912
    %v3217 = vsel %vm3216, %v3215, %v3210
    %v3218 = vadd.s32 %v3150, 4294967216
    %v3219 = vlaneseq
    %v3220 = vshrl.u32 %v3219, 7
    %v3221 = vsub.s32 %v3218, %v3220
    %v3222 = vrot.slane %v3117, %v3221
    %vm3223 = vcmask 720512
    %v3224 = vsel %vm3223, %v3222, %v3217
    %v3225 = vadd.s32 %v3150, 4294967208
    %v3226 = vlaneseq
    %v3227 = vshrl.u32 %v3226, 7
    %v3228 = vsub.s32 %v3225, %v3227
    %v3229 = vrot.slane %v3120, %v3228
    %vm3230 = vcmask 786112
    %v3231 = vsel %vm3230, %v3229, %v3224
    %v3232 = vadd.s32 %v3150, 4294967200
    %v3233 = vlaneseq
    %v3234 = vshrl.u32 %v3233, 7
    %v3235 = vsub.s32 %v3232, %v3234
    %v3236 = vrot.slane %v3123, %v3235
    %vm3237 = vcmask 851712
    %v3238 = vsel %vm3237, %v3236, %v3231
    %v3239 = vadd.s32 %v3150, 4294967192
    %v3240 = vlaneseq
    %v3241 = vshrl.u32 %v3240, 7
    %v3242 = vsub.s32 %v3239, %v3241
    %v3243 = vrot.slane %v3126, %v3242
    %vm3244 = vcmask 917312
    %v3245 = vsel %vm3244, %v3243, %v3238
    %v3246 = vadd.s32 %v3150, 4294967184
    %v3247 = vlaneseq
    %v3248 = vshrl.u32 %v3247, 7
    %v3249 = vsub.s32 %v3246, %v3248
    %v3250 = vrot.slane %v3129, %v3249
    %vm3251 = vcmask 982912
    %v3252 = vsel %vm3251, %v3250, %v3245
    %v3253 = vadd.s32 %v3150, 4294967176
    %v3254 = vlaneseq
    %v3255 = vshrl.u32 %v3254, 7
    %v3256 = vsub.s32 %v3253, %v3255
    %v3257 = vrot.slane %v3132, %v3256
    %vm3258 = vcmask 1048512
    %v3259 = vsel %vm3258, %v3257, %v3252
    %3261 = vst [vmem:[#allocation7] sm:$0x1] %v3259
    // Predicated region
    $region42: #{gcn_forward_fused.1} parent=1 // pred_check
      _
    $region43: #{gcn_forward_fused.1} parent=1 // pred_check_branch
      %3263 = sbr.rel (0) target = $region45
    $region44: #{gcn_forward_fused.1} parent=1 // pred_region
      %s3265 = ssub.s32 16, 16
      %3266 = vsyncadd [#allocation4], %s3265
      %s3268 = sshll.u32 [#allocation7], 4
      %s3269 = int_to_ptr.vmem [resolvable:$true] %s3268
      %3271 = dma.vmem_to_hbm [thread:$0]  %s3269, 16, %s8, [#allocation4]
    $region45: #{gcn_forward_fused.1} parent=1 // pred_fallthru
      _
    // Predicated region
    $region46: #{gcn_forward_fused.1} parent=1 // pred_check
      _
    $region47: #{gcn_forward_fused.1} parent=1 // pred_check_branch
      %3273 = sbr.rel (0) target = $region49
    $region48: #{gcn_forward_fused.1} parent=1 // pred_region
      %3274 = dma.done [#allocation4], 16
    $region49: #{gcn_forward_fused.1} parent=1 // pred_fallthru
      _
    %3275 = vsyncpa [#allocation3], 1
    %3276 = vsyncpa [#allocation6], 1
    %3277 = vsyncpa [#allocation4], 1

</llo_original>
